<compile_context>
chip_gen: v5e
topology: v5e:2x2
jax: 0.10.0
libtpu: 0.0.40
codegen_flags: <defaults>
</compile_context>

<pallas_src>
import functools

import jax
import jax.numpy as jnp
from jax import lax
from jax.experimental import pallas as pl
from jax.experimental.pallas import tpu as pltpu

EPS = 1e-5  # nn.LayerNorm default


# ----------------------------- in-kernel helpers -----------------------------

def _layernorm(x, w, b):
    # x: (R, C) f32, w/b: (1, C) f32
    mu = jnp.mean(x, axis=-1, keepdims=True)
    xc = x - mu
    var = jnp.mean(xc * xc, axis=-1, keepdims=True)
    return xc * lax.rsqrt(var + EPS) * w + b


# --------------------------- fused forward kernel ----------------------------

def _fused_prompt_kernel(num_heads,
                         text_ref, vis_ref, mask_ref, shared_ref,
                         lvec_ref, wq_ref, wkv_ref, wp_ref,
                         w1_ref, b1_ref, w2_ref,
                         o_ref,
                         x_sc, vis_sc):
    l = pl.program_id(0)
    last = pl.num_programs(0) - 1

    BN, C = x_sc.shape
    H = num_heads
    D = C // H
    scale = D ** -0.5

    # ---- layer 0: load text into the resident accumulator, LayerNorm visual --
    @pl.when(l == 0)
    def _():
        x_sc[...] = text_ref[...].astype(jnp.float32)
        vis_f32 = vis_ref[...].astype(jnp.float32)
        vis_sc[...] = _layernorm(vis_f32, shared_ref[0:1, :],
                                 shared_ref[1:2, :]).astype(jnp.bfloat16)

    x = x_sc[...]           # (B*N, C) f32, carried across layers in VMEM
    vis_bf = vis_sc[...]    # (B*M, C) bf16, normalized once
    mask = mask_ref[...]    # (B*N, B*M) additive block-diagonal mask (0 / -1e30)

    # packed per-layer vectors: rows = [n1w, n1b, proj_b, n3w, n3b, fc2_b, 0, 0]
    n1w = lvec_ref[0:1, :]
    n1b = lvec_ref[1:2, :]
    bp = lvec_ref[2:3, :]
    n3w = lvec_ref[3:4, :]
    n3b = lvec_ref[4:5, :]
    b2 = lvec_ref[5:6, :]

    # ---- cross attention (batch folded into rows; mask isolates batches) -----
    xn = _layernorm(x, n1w, n1b)
    q_bf = jnp.dot(xn.astype(jnp.bfloat16), wq_ref[...],
                   preferred_element_type=jnp.float32).astype(jnp.bfloat16)
    kv = jnp.dot(vis_bf, wkv_ref[...],
                 preferred_element_type=jnp.float32)            # (B*M, 2C)
    k_bf = kv[:, :C].astype(jnp.bfloat16)
    v_bf = kv[:, C:].astype(jnp.bfloat16)

    acc = jnp.zeros((BN, C), jnp.float32)
    for h in range(H):      # static head loop (small H here)
        qh = q_bf[:, h * D:(h + 1) * D]                          # (B*N, D)
        kh = k_bf[:, h * D:(h + 1) * D]                          # (B*M, D)
        vh = v_bf[:, h * D:(h + 1) * D]                          # (B*M, D)
        # contract last dim of both operands -> no kh.T materialization
        s = lax.dot_general(qh, kh, (((1,), (1,)), ((), ())),
                            preferred_element_type=jnp.float32) * scale + mask
        s = s - jnp.max(s, axis=-1, keepdims=True)
        p = jnp.exp(s)
        p = p * pl.reciprocal(jnp.sum(p, axis=-1, keepdims=True), approx=True)
        ctx = jnp.dot(p.astype(jnp.bfloat16), vh,
                      preferred_element_type=jnp.float32)        # (B*N, D)
        # accumulate straight into the output projection (sublane-aligned ref slice)
        acc = acc + jnp.dot(ctx.astype(jnp.bfloat16),
                            wp_ref[h * D:(h + 1) * D, :],
                            preferred_element_type=jnp.float32)
    x = x + acc + bp

    # ---- MLP branch -----------------------------------------------------------
    xn3 = _layernorm(x, n3w, n3b)
    h1 = jnp.dot(xn3.astype(jnp.bfloat16), w1_ref[...],
                 preferred_element_type=jnp.float32) + b1_ref[...]
    h1 = h1 * jax.nn.sigmoid(1.702 * h1)                  # QuickGELU (f32, EUP)
    x = x + jnp.dot(h1.astype(jnp.bfloat16), w2_ref[...],
                    preferred_element_type=jnp.float32) + b2

    x_sc[...] = x

    # ---- final layer: apply alpha; the only output write ----------------------
    @pl.when(l == last)
    def _():
        o_ref[...] = (x * shared_ref[2:3, :]).astype(o_ref.dtype)


def video_specific_prompt(text, visual, params, num_heads):
    B, N, C = text.shape
    _, M, _ = visual.shape
    L = params["wq"].shape[0]
    BN, BM = B * N, B * M

    # fold batch into rows (contiguous-dim collapse: free in XLA)
    text2d = text.reshape(BN, C)
    vis2d = visual.reshape(BM, C)

    # additive block-diagonal mask: query row i (batch i//N) may only attend to
    # key column j (batch j//M).  Precomputed host-side, DMA'd once.
    row_b = jnp.arange(BN, dtype=jnp.int32)[:, None] // N
    col_b = jnp.arange(BM, dtype=jnp.int32)[None, :] // M
    mask = jnp.where(row_b == col_b, 0.0, -1e30).astype(jnp.float32)

    kernel = functools.partial(_fused_prompt_kernel, num_heads)

    grid_spec = pltpu.PrefetchScalarGridSpec(
        num_scalar_prefetch=0,
        grid=(L,),                                    # layer axis only: weights
        in_specs=[                                    # stream once per layer
            pl.BlockSpec((BN, C), lambda l: (0, 0)),            # text rows
            pl.BlockSpec((BM, C), lambda l: (0, 0)),            # visual rows
            pl.BlockSpec((BN, BM), lambda l: (0, 0)),           # attn mask
            pl.BlockSpec((3, C), lambda l: (0, 0)),             # [nw, nb, alpha]
            pl.BlockSpec((None, 8, C), lambda l: (l, 0, 0)),    # packed vecs
            pl.BlockSpec((None, C, C), lambda l: (l, 0, 0)),    # Wq      (bf16)
            pl.BlockSpec((None, C, 2 * C), lambda l: (l, 0, 0)),  # Wkv   (bf16)
            pl.BlockSpec((None, C, C), lambda l: (l, 0, 0)),    # Wproj   (bf16)
            pl.BlockSpec((None, C, 4 * C), lambda l: (l, 0, 0)),  # fc1 W (bf16)
            pl.BlockSpec((None, 1, 4 * C), lambda l: (l, 0, 0)),  # fc1 b
            pl.BlockSpec((None, 4 * C, C), lambda l: (l, 0, 0)),  # fc2 W (bf16)
        ],
        out_specs=pl.BlockSpec((BN, C), lambda l: (0, 0)),
        scratch_shapes=[
            pltpu.VMEM((BN, C), jnp.float32),     # x accumulator (f32)
            pltpu.VMEM((BM, C), jnp.bfloat16),    # normalized visual
        ],
    )

    out2d = pl.pallas_call(
        kernel,
        out_shape=jax.ShapeDtypeStruct((BN, C), text.dtype),
        grid_spec=grid_spec,
        compiler_params=pltpu.CompilerParams(
            dimension_semantics=("arbitrary",),     # sequential layer carry
            vmem_limit_bytes=64 * 1024 * 1024,
        ),
    )(text2d, vis2d, mask, params["shared"], params["lvec"],
      params["wq"], params["wkv"], params["wp"],
      params["w1"], params["b1"], params["w2"])

    return out2d.reshape(B, N, C)


# ------------------------------ parameter init --------------------------------

def init_params(key, embed_dim, layers, alpha=0.1):
    C = embed_dim
    k_w, k_v = jax.random.split(key, 2)

    def trunc_normal(k, shape):
        return (0.02 * jax.random.truncated_normal(k, -2.0, 2.0, shape)).astype(jnp.float32)

    wq, wkv, wp, w1, w2 = [], [], [], [], []
    for li in range(layers):
        ks = jax.random.split(jax.random.fold_in(k_w, li), 6)
        wq.append(trunc_normal(ks[0], (C, C)))
        wk = trunc_normal(ks[1], (C, C))
        wv = trunc_normal(ks[2], (C, C))
        wkv.append(jnp.concatenate([wk, wv], axis=-1))   # fused (C, 2C)
        wp.append(trunc_normal(ks[3], (C, C)))
        w1.append(trunc_normal(ks[4], (C, 4 * C)))
        w2.append(trunc_normal(ks[5], (4 * C, C)))

    # small per-layer vectors (random, to exercise every code path; the torch
    # init would make them 0 / 1).  Packed rows: n1w, n1b, bp, n3w, n3b, b2.
    def rnd(i, shape, scale=0.05):
        return scale * jax.random.normal(jax.random.fold_in(k_v, i), shape)

    lvec = jnp.zeros((layers, 8, C), jnp.float32)
    lvec = lvec.at[:, 0, :].set(1.0 + rnd(0, (layers, C)))   # norm1 weight
    lvec = lvec.at[:, 1, :].set(rnd(1, (layers, C)))         # norm1 bias
    lvec = lvec.at[:, 2, :].set(rnd(2, (layers, C)))         # proj bias
    lvec = lvec.at[:, 3, :].set(1.0 + rnd(3, (layers, C)))   # norm3 weight
    lvec = lvec.at[:, 4, :].set(rnd(4, (layers, C)))         # norm3 bias
    lvec = lvec.at[:, 5, :].set(rnd(5, (layers, C)))         # fc2 bias

    shared = jnp.stack([
        1.0 + rnd(6, (C,)),                 # visual LN weight
        rnd(7, (C,)),                       # visual LN bias
        jnp.full((C,), alpha, jnp.float32),  # alpha
    ]).astype(jnp.float32)

    return {
        "shared": shared,                                # (3, C) f32
        "lvec": lvec,                                    # (L, 8, C) f32
        "wq": jnp.stack(wq).astype(jnp.bfloat16),        # (L, C, C)
        "wkv": jnp.stack(wkv).astype(jnp.bfloat16),      # (L, C, 2C)
        "wp": jnp.stack(wp).astype(jnp.bfloat16),        # (L, C, C)
        "w1": jnp.stack(w1).astype(jnp.bfloat16),        # (L, C, 4C)
        "b1": rnd(8, (layers, 1, 4 * C)).astype(jnp.float32),
        "w2": jnp.stack(w2).astype(jnp.bfloat16),        # (L, 4C, C)
    }


# ------------------------------ pure-JAX reference -----------------------------

def _ref_ln(x, w, b):
    mu = jnp.mean(x, axis=-1, keepdims=True)
    var = jnp.mean((x - mu) ** 2, axis=-1, keepdims=True)
    return (x - mu) * lax.rsqrt(var + EPS) * w + b


def reference_forward(text, visual, params, num_heads):
    B, M, C = visual.shape
    N = text.shape[1]
    D = C // num_heads
    scale = D ** -0.5
    L = params["wq"].shape[0]

    norm_w, norm_b, alpha = (params["shared"][0], params["shared"][1],
                             params["shared"][2])
    vis = _ref_ln(visual, norm_w, norm_b)
    x = text
    for li in range(L):
        lv = params["lvec"][li]
        n1w, n1b, bp, n3w, n3b, b2 = lv[0], lv[1], lv[2], lv[3], lv[4], lv[5]
        wq = params["wq"][li].astype(jnp.float32)
        wkv = params["wkv"][li].astype(jnp.float32)
        wk, wv = wkv[:, :C], wkv[:, C:]
        wp = params["wp"][li].astype(jnp.float32)
        w1 = params["w1"][li].astype(jnp.float32)
        b1 = params["b1"][li].reshape(-1)
        w2 = params["w2"][li].astype(jnp.float32)

        xn = _ref_ln(x, n1w, n1b)
        q = xn @ wq
        k = vis @ wk
        v = vis @ wv
        qh = q.reshape(B, N, num_heads, D).transpose(0, 2, 1, 3)
        kh = k.reshape(B, M, num_heads, D).transpose(0, 2, 1, 3)
        vh = v.reshape(B, M, num_heads, D).transpose(0, 2, 1, 3)
        attn = jax.nn.softmax(jnp.einsum("bhnd,bhmd->bhnm", qh, kh) * scale, axis=-1)
        o = jnp.einsum("bhnm,bhmd->bhnd", attn, vh).transpose(0, 2, 1, 3).reshape(B, N, C)
        x = x + o @ wp + bp
        xn3 = _ref_ln(x, n3w, n3b)
        h1 = xn3 @ w1 + b1
        h1 = h1 * jax.nn.sigmoid(1.702 * h1)
        x = x + h1 @ w2 + b2
    return alpha * x


# ----------------------------------- main ---------------------------------------

if __name__ == "__main__":
    # embed_dim must be a multiple of 64 (num_heads = embed_dim // 64).
    B, N, M, C = 2, 8, 16, 128
    num_layers = 2
    num_heads = C // 64  # = 2

    key = jax.random.PRNGKey(0)
    k_text, k_vis, k_params = jax.random.split(key, 3)
    text = jax.random.normal(k_text, (B, N, C), jnp.float32)
    visual = jax.random.normal(k_vis, (B, M, C), jnp.float32)
    params = init_params(k_params, C, num_layers, alpha=0.1)

    out = jax.block_until_ready(video_specific_prompt(text, visual, params, num_heads))
    ref = jax.block_until_ready(reference_forward(text, visual, params, num_heads))

    assert out.shape == (B, N, C)
    max_err = float(jnp.max(jnp.abs(out - ref)))
    # bf16 weight/activation matmuls + approx-reciprocal softmax vs f32 reference
    assert jnp.allclose(out, ref, rtol=2e-2, atol=2e-2), \
        f"mismatch vs reference (max |err|={max_err})"

    print("KERNEL_OK")
</pallas_src>

<mosaic_0001>
module attributes {stable_mosaic.version = 11 : i64} {
  func.func @_fused_prompt_kernel(%arg0: i32, %arg1: memref<16x128xf32, #tpu.memory_space<vmem>>, %arg2: memref<32x128xf32, #tpu.memory_space<vmem>>, %arg3: memref<16x32xf32, #tpu.memory_space<vmem>>, %arg4: memref<3x128xf32, #tpu.memory_space<vmem>>, %arg5: memref<1x8x128xf32, #tpu.memory_space<vmem>>, %arg6: memref<1x128x128xbf16, #tpu.memory_space<vmem>>, %arg7: memref<1x128x256xbf16, #tpu.memory_space<vmem>>, %arg8: memref<1x128x128xbf16, #tpu.memory_space<vmem>>, %arg9: memref<1x128x512xbf16, #tpu.memory_space<vmem>>, %arg10: memref<1x1x512xf32, #tpu.memory_space<vmem>>, %arg11: memref<1x512x128xbf16, #tpu.memory_space<vmem>>, %arg12: memref<16x128xf32, #tpu.memory_space<vmem>>, %arg13: memref<16x128xf32, #tpu.memory_space<vmem>>, %arg14: memref<32x128xbf16, #tpu.memory_space<vmem>>) attributes {dimension_semantics = [#tpu.dimension_semantics<arbitrary>], iteration_bounds = array<i64: 2>, scalar_prefetch = 0 : i64, scratch_operands = 2 : i64, tpu.core_type = #tpu.core_type<tc>, window_params = [{pipeline_mode = #tpu.pipeline_mode<synchronous>, transform_indices = @transform_0, window_bounds = array<i64: 16, 128>}, {pipeline_mode = #tpu.pipeline_mode<synchronous>, transform_indices = @transform_1, window_bounds = array<i64: 32, 128>}, {pipeline_mode = #tpu.pipeline_mode<synchronous>, transform_indices = @transform_2, window_bounds = array<i64: 16, 32>}, {pipeline_mode = #tpu.pipeline_mode<synchronous>, transform_indices = @transform_3, window_bounds = array<i64: 3, 128>}, {transform_indices = @transform_4, window_bounds = array<i64: 1, 8, 128>}, {transform_indices = @transform_5, window_bounds = array<i64: 1, 128, 128>}, {transform_indices = @transform_6, window_bounds = array<i64: 1, 128, 256>}, {transform_indices = @transform_7, window_bounds = array<i64: 1, 128, 128>}, {transform_indices = @transform_8, window_bounds = array<i64: 1, 128, 512>}, {transform_indices = @transform_9, window_bounds = array<i64: 1, 1, 512>}, {transform_indices = @transform_10, window_bounds = array<i64: 1, 512, 128>}, {pipeline_mode = #tpu.pipeline_mode<synchronous>, transform_indices = @transform_11, window_bounds = array<i64: 16, 128>}]} {
    %c0_i32 = arith.constant 0 : i32
    %0 = arith.cmpi eq, %arg0, %c0_i32 : i32
    %1 = arith.extui %0 : i1 to i32
    %c0_i32_0 = arith.constant 0 : i32
    %2 = arith.cmpi ne, %1, %c0_i32_0 : i32
    scf.if %2 {
      %c0_70 = arith.constant 0 : index
      %c0_71 = arith.constant 0 : index
      %149 = vector.load %arg1[%c0_70, %c0_71] : memref<16x128xf32, #tpu.memory_space<vmem>>, vector<16x128xf32>
      %c0_72 = arith.constant 0 : index
      %c0_73 = arith.constant 0 : index
      %150 = vector.load %arg13[%c0_72, %c0_73] : memref<16x128xf32, #tpu.memory_space<vmem>>, vector<16x128xf32>
      tpu.vector_store %arg13[%c0_72, %c0_73], %149 {strides = array<i32>} : memref<16x128xf32, #tpu.memory_space<vmem>>, vector<16x128xf32>,
      %c0_74 = arith.constant 0 : index
      %c0_75 = arith.constant 0 : index
      %151 = vector.load %arg2[%c0_74, %c0_75] : memref<32x128xf32, #tpu.memory_space<vmem>>, vector<32x128xf32>
      %c0_76 = arith.constant 0 : index
      %c0_77 = arith.constant 0 : index
      %152 = vector.load %arg4[%c0_76, %c0_77] : memref<3x128xf32, #tpu.memory_space<vmem>>, vector<1x128xf32>
      %c1_78 = arith.constant 1 : index
      %c0_79 = arith.constant 0 : index
      %153 = vector.load %arg4[%c1_78, %c0_79] : memref<3x128xf32, #tpu.memory_space<vmem>>, vector<1x128xf32>
      %cst_80 = arith.constant dense<0.000000e+00> : vector<32xf32>
      %154 = vector.multi_reduction <add>, %151, %cst_80 [1] : vector<32x128xf32> to vector<32xf32>
      %155 = vector.shape_cast %154 : vector<32xf32> to vector<32x1xf32>
      %cst_81 = arith.constant 1.280000e+02 : f32
      %156 = vector.broadcast %cst_81 : f32 to vector<32x1xf32>
      %157 = arith.divf %155, %156 : vector<32x1xf32>
      %158 = vector.broadcast %157 : vector<32x1xf32> to vector<32x128xf32>
      %159 = arith.subf %151, %158 : vector<32x128xf32>
      %160 = arith.mulf %159, %159 : vector<32x128xf32>
      %cst_82 = arith.constant dense<0.000000e+00> : vector<32xf32>
      %161 = vector.multi_reduction <add>, %160, %cst_82 [1] : vector<32x128xf32> to vector<32xf32>
      %162 = vector.shape_cast %161 : vector<32xf32> to vector<32x1xf32>
      %cst_83 = arith.constant 1.280000e+02 : f32
      %163 = vector.broadcast %cst_83 : f32 to vector<32x1xf32>
      %164 = arith.divf %162, %163 : vector<32x1xf32>
      %cst_84 = arith.constant 9.99999974E-6 : f32
      %165 = vector.broadcast %cst_84 : f32 to vector<32x1xf32>
      %166 = arith.addf %164, %165 : vector<32x1xf32>
      %167 = math.rsqrt %166 : vector<32x1xf32>
      %168 = vector.broadcast %167 : vector<32x1xf32> to vector<32x128xf32>
      %169 = arith.mulf %159, %168 : vector<32x128xf32>
      %170 = vector.broadcast %152 : vector<1x128xf32> to vector<32x128xf32>
      %171 = arith.mulf %169, %170 : vector<32x128xf32>
      %172 = vector.broadcast %153 : vector<1x128xf32> to vector<32x128xf32>
      %173 = arith.addf %171, %172 : vector<32x128xf32>
      %174 = arith.truncf %173 : vector<32x128xf32> to vector<32x128xbf16>
      %c0_85 = arith.constant 0 : index
      %c0_86 = arith.constant 0 : index
      %175 = vector.load %arg14[%c0_85, %c0_86] : memref<32x128xbf16, #tpu.memory_space<vmem>>, vector<32x128xbf16>
      tpu.vector_store %arg14[%c0_85, %c0_86], %174 {strides = array<i32>} : memref<32x128xbf16, #tpu.memory_space<vmem>>, vector<32x128xbf16>,
    } else {
    }
    %c0 = arith.constant 0 : index
    %c0_1 = arith.constant 0 : index
    %3 = vector.load %arg13[%c0, %c0_1] : memref<16x128xf32, #tpu.memory_space<vmem>>, vector<16x128xf32>
    %c0_2 = arith.constant 0 : index
    %c0_3 = arith.constant 0 : index
    %4 = vector.load %arg14[%c0_2, %c0_3] : memref<32x128xbf16, #tpu.memory_space<vmem>>, vector<32x128xbf16>
    %c0_4 = arith.constant 0 : index
    %c0_5 = arith.constant 0 : index
    %5 = vector.load %arg3[%c0_4, %c0_5] : memref<16x32xf32, #tpu.memory_space<vmem>>, vector<16x32xf32>
    %c0_6 = arith.constant 0 : index
    %c0_7 = arith.constant 0 : index
    %c0_8 = arith.constant 0 : index
    %6 = vector.load %arg5[%c0_6, %c0_7, %c0_8] : memref<1x8x128xf32, #tpu.memory_space<vmem>>, vector<1x1x128xf32>
    %7 = vector.shape_cast %6 : vector<1x1x128xf32> to vector<1x128xf32>
    %c0_9 = arith.constant 0 : index
    %c1 = arith.constant 1 : index
    %c0_10 = arith.constant 0 : index
    %8 = vector.load %arg5[%c0_9, %c1, %c0_10] : memref<1x8x128xf32, #tpu.memory_space<vmem>>, vector<1x1x128xf32>
    %9 = vector.shape_cast %8 : vector<1x1x128xf32> to vector<1x128xf32>
    %c0_11 = arith.constant 0 : index
    %c2 = arith.constant 2 : index
    %c0_12 = arith.constant 0 : index
    %10 = vector.load %arg5[%c0_11, %c2, %c0_12] : memref<1x8x128xf32, #tpu.memory_space<vmem>>, vector<1x1x128xf32>
    %11 = vector.shape_cast %10 : vector<1x1x128xf32> to vector<1x128xf32>
    %c0_13 = arith.constant 0 : index
    %c3 = arith.constant 3 : index
    %c0_14 = arith.constant 0 : index
    %12 = vector.load %arg5[%c0_13, %c3, %c0_14] : memref<1x8x128xf32, #tpu.memory_space<vmem>>, vector<1x1x128xf32>
    %13 = vector.shape_cast %12 : vector<1x1x128xf32> to vector<1x128xf32>
    %c0_15 = arith.constant 0 : index
    %c4 = arith.constant 4 : index
    %c0_16 = arith.constant 0 : index
    %14 = vector.load %arg5[%c0_15, %c4, %c0_16] : memref<1x8x128xf32, #tpu.memory_space<vmem>>, vector<1x1x128xf32>
    %15 = vector.shape_cast %14 : vector<1x1x128xf32> to vector<1x128xf32>
    %c0_17 = arith.constant 0 : index
    %c5 = arith.constant 5 : index
    %c0_18 = arith.constant 0 : index
    %16 = vector.load %arg5[%c0_17, %c5, %c0_18] : memref<1x8x128xf32, #tpu.memory_space<vmem>>, vector<1x1x128xf32>
    %17 = vector.shape_cast %16 : vector<1x1x128xf32> to vector<1x128xf32>
    %cst = arith.constant dense<0.000000e+00> : vector<16xf32>
    %18 = vector.multi_reduction <add>, %3, %cst [1] : vector<16x128xf32> to vector<16xf32>
    %19 = vector.shape_cast %18 : vector<16xf32> to vector<16x1xf32>
    %cst_19 = arith.constant 1.280000e+02 : f32
    %20 = vector.broadcast %cst_19 : f32 to vector<16x1xf32>
    %21 = arith.divf %19, %20 : vector<16x1xf32>
    %22 = vector.broadcast %21 : vector<16x1xf32> to vector<16x128xf32>
    %23 = arith.subf %3, %22 : vector<16x128xf32>
    %24 = arith.mulf %23, %23 : vector<16x128xf32>
    %cst_20 = arith.constant dense<0.000000e+00> : vector<16xf32>
    %25 = vector.multi_reduction <add>, %24, %cst_20 [1] : vector<16x128xf32> to vector<16xf32>
    %26 = vector.shape_cast %25 : vector<16xf32> to vector<16x1xf32>
    %cst_21 = arith.constant 1.280000e+02 : f32
    %27 = vector.broadcast %cst_21 : f32 to vector<16x1xf32>
    %28 = arith.divf %26, %27 : vector<16x1xf32>
    %cst_22 = arith.constant 9.99999974E-6 : f32
    %29 = vector.broadcast %cst_22 : f32 to vector<16x1xf32>
    %30 = arith.addf %28, %29 : vector<16x1xf32>
    %31 = math.rsqrt %30 : vector<16x1xf32>
    %32 = vector.broadcast %31 : vector<16x1xf32> to vector<16x128xf32>
    %33 = arith.mulf %23, %32 : vector<16x128xf32>
    %34 = vector.broadcast %7 : vector<1x128xf32> to vector<16x128xf32>
    %35 = arith.mulf %33, %34 : vector<16x128xf32>
    %36 = vector.broadcast %9 : vector<1x128xf32> to vector<16x128xf32>
    %37 = arith.addf %35, %36 : vector<16x128xf32>
    %38 = arith.truncf %37 : vector<16x128xf32> to vector<16x128xbf16>
    %c0_23 = arith.constant 0 : index
    %c0_24 = arith.constant 0 : index
    %c0_25 = arith.constant 0 : index
    %39 = vector.load %arg6[%c0_23, %c0_24, %c0_25] : memref<1x128x128xbf16, #tpu.memory_space<vmem>>, vector<1x128x128xbf16>
    %40 = vector.shape_cast %39 : vector<1x128x128xbf16> to vector<128x128xbf16>
    %cst_26 = arith.constant dense<0.000000e+00> : vector<16x128xf32>
    %41 = tpu.matmul %38, %40, %cst_26 {dimension_numbers = #tpu.dot_dimension_numbers<[1], [0], [0], [1], [0, 0, 1, 1], [], []>} : vector<16x128xbf16>, vector<128x128xbf16>, vector<16x128xf32> -> vector<16x128xf32>
    %42 = arith.truncf %41 : vector<16x128xf32> to vector<16x128xbf16>
    %c0_27 = arith.constant 0 : index
    %c0_28 = arith.constant 0 : index
    %c0_29 = arith.constant 0 : index
    %43 = vector.load %arg7[%c0_27, %c0_28, %c0_29] : memref<1x128x256xbf16, #tpu.memory_space<vmem>>, vector<1x128x256xbf16>
    %44 = vector.shape_cast %43 : vector<1x128x256xbf16> to vector<128x256xbf16>
    %cst_30 = arith.constant dense<0.000000e+00> : vector<32x256xf32>
    %45 = tpu.matmul %4, %44, %cst_30 {dimension_numbers = #tpu.dot_dimension_numbers<[1], [0], [0], [1], [0, 0, 1, 1], [], []>} : vector<32x128xbf16>, vector<128x256xbf16>, vector<32x256xf32> -> vector<32x256xf32>
    %46 = vector.extract_strided_slice %45 {offsets = [0, 0], sizes = [32, 128], strides = [1, 1]} : vector<32x256xf32> to vector<32x128xf32>
    %47 = arith.truncf %46 : vector<32x128xf32> to vector<32x128xbf16>
    %48 = vector.extract_strided_slice %45 {offsets = [0, 128], sizes = [32, 128], strides = [1, 1]} : vector<32x256xf32> to vector<32x128xf32>
    %49 = arith.truncf %48 : vector<32x128xf32> to vector<32x128xbf16>
    %cst_31 = arith.constant 0.000000e+00 : f32
    %50 = vector.broadcast %cst_31 : f32 to vector<16x128xf32>
    %51 = vector.extract_strided_slice %42 {offsets = [0, 0], sizes = [16, 64], strides = [1, 1]} : vector<16x128xbf16> to vector<16x64xbf16>
    %52 = vector.extract_strided_slice %47 {offsets = [0, 0], sizes = [32, 64], strides = [1, 1]} : vector<32x128xbf16> to vector<32x64xbf16>
    %53 = vector.extract_strided_slice %49 {offsets = [0, 0], sizes = [32, 64], strides = [1, 1]} : vector<32x128xbf16> to vector<32x64xbf16>
    %cst_32 = arith.constant dense<0.000000e+00> : vector<16x32xf32>
    %54 = tpu.matmul %51, %52, %cst_32 {dimension_numbers = #tpu.dot_dimension_numbers<[1], [1], [0], [0], [0, 0, 1, 0], [], []>} : vector<16x64xbf16>, vector<32x64xbf16>, vector<16x32xf32> -> vector<16x32xf32>
    %cst_33 = arith.constant 1.250000e-01 : f32
    %55 = vector.broadcast %cst_33 : f32 to vector<16x32xf32>
    %56 = arith.mulf %54, %55 : vector<16x32xf32>
    %57 = arith.addf %56, %5 : vector<16x32xf32>
    %cst_34 = arith.constant dense<0xFF800000> : vector<16xf32>
    %58 = vector.multi_reduction <maximumf>, %57, %cst_34 [1] : vector<16x32xf32> to vector<16xf32>
    %59 = vector.shape_cast %58 : vector<16xf32> to vector<16x1xf32>
    %60 = vector.broadcast %59 : vector<16x1xf32> to vector<16x32xf32>
    %61 = arith.subf %57, %60 : vector<16x32xf32>
    %62 = math.exp %61 : vector<16x32xf32>
    %cst_35 = arith.constant dense<0.000000e+00> : vector<16xf32>
    %63 = vector.multi_reduction <add>, %62, %cst_35 [1] : vector<16x32xf32> to vector<16xf32>
    %64 = vector.shape_cast %63 : vector<16xf32> to vector<16x1xf32>
    %65 = tpu.reciprocal %64 {approx = true} : vector<16x1xf32> -> vector<16x1xf32>
    %66 = vector.broadcast %65 : vector<16x1xf32> to vector<16x32xf32>
    %67 = arith.mulf %62, %66 : vector<16x32xf32>
    %68 = arith.truncf %67 : vector<16x32xf32> to vector<16x32xbf16>
    %cst_36 = arith.constant dense<0.000000e+00> : vector<16x64xf32>
    %69 = tpu.matmul %68, %53, %cst_36 {dimension_numbers = #tpu.dot_dimension_numbers<[1], [0], [0], [1], [0, 0, 1, 1], [], []>} : vector<16x32xbf16>, vector<32x64xbf16>, vector<16x64xf32> -> vector<16x64xf32>
    %70 = arith.truncf %69 : vector<16x64xf32> to vector<16x64xbf16>
    %c0_37 = arith.constant 0 : index
    %c0_38 = arith.constant 0 : index
    %c0_39 = arith.constant 0 : index
    %71 = vector.load %arg8[%c0_37, %c0_38, %c0_39] : memref<1x128x128xbf16, #tpu.memory_space<vmem>>, vector<1x64x128xbf16>
    %72 = vector.shape_cast %71 : vector<1x64x128xbf16> to vector<64x128xbf16>
    %cst_40 = arith.constant dense<0.000000e+00> : vector<16x128xf32>
    %73 = tpu.matmul %70, %72, %cst_40 {dimension_numbers = #tpu.dot_dimension_numbers<[1], [0], [0], [1], [0, 0, 1, 1], [], []>} : vector<16x64xbf16>, vector<64x128xbf16>, vector<16x128xf32> -> vector<16x128xf32>
    %74 = arith.addf %50, %73 : vector<16x128xf32>
    %75 = vector.extract_strided_slice %42 {offsets = [0, 64], sizes = [16, 64], strides = [1, 1]} : vector<16x128xbf16> to vector<16x64xbf16>
    %76 = vector.extract_strided_slice %47 {offsets = [0, 64], sizes = [32, 64], strides = [1, 1]} : vector<32x128xbf16> to vector<32x64xbf16>
    %77 = vector.extract_strided_slice %49 {offsets = [0, 64], sizes = [32, 64], strides = [1, 1]} : vector<32x128xbf16> to vector<32x64xbf16>
    %cst_41 = arith.constant dense<0.000000e+00> : vector<16x32xf32>
    %78 = tpu.matmul %75, %76, %cst_41 {dimension_numbers = #tpu.dot_dimension_numbers<[1], [1], [0], [0], [0, 0, 1, 0], [], []>} : vector<16x64xbf16>, vector<32x64xbf16>, vector<16x32xf32> -> vector<16x32xf32>
    %cst_42 = arith.constant 1.250000e-01 : f32
    %79 = vector.broadcast %cst_42 : f32 to vector<16x32xf32>
    %80 = arith.mulf %78, %79 : vector<16x32xf32>
    %81 = arith.addf %80, %5 : vector<16x32xf32>
    %cst_43 = arith.constant dense<0xFF800000> : vector<16xf32>
    %82 = vector.multi_reduction <maximumf>, %81, %cst_43 [1] : vector<16x32xf32> to vector<16xf32>
    %83 = vector.shape_cast %82 : vector<16xf32> to vector<16x1xf32>
    %84 = vector.broadcast %83 : vector<16x1xf32> to vector<16x32xf32>
    %85 = arith.subf %81, %84 : vector<16x32xf32>
    %86 = math.exp %85 : vector<16x32xf32>
    %cst_44 = arith.constant dense<0.000000e+00> : vector<16xf32>
    %87 = vector.multi_reduction <add>, %86, %cst_44 [1] : vector<16x32xf32> to vector<16xf32>
    %88 = vector.shape_cast %87 : vector<16xf32> to vector<16x1xf32>
    %89 = tpu.reciprocal %88 {approx = true} : vector<16x1xf32> -> vector<16x1xf32>
    %90 = vector.broadcast %89 : vector<16x1xf32> to vector<16x32xf32>
    %91 = arith.mulf %86, %90 : vector<16x32xf32>
    %92 = arith.truncf %91 : vector<16x32xf32> to vector<16x32xbf16>
    %cst_45 = arith.constant dense<0.000000e+00> : vector<16x64xf32>
    %93 = tpu.matmul %92, %77, %cst_45 {dimension_numbers = #tpu.dot_dimension_numbers<[1], [0], [0], [1], [0, 0, 1, 1], [], []>} : vector<16x32xbf16>, vector<32x64xbf16>, vector<16x64xf32> -> vector<16x64xf32>
    %94 = arith.truncf %93 : vector<16x64xf32> to vector<16x64xbf16>
    %c0_46 = arith.constant 0 : index
    %c64 = arith.constant 64 : index
    %c0_47 = arith.constant 0 : index
    %95 = vector.load %arg8[%c0_46, %c64, %c0_47] : memref<1x128x128xbf16, #tpu.memory_space<vmem>>, vector<1x64x128xbf16>
    %96 = vector.shape_cast %95 : vector<1x64x128xbf16> to vector<64x128xbf16>
    %cst_48 = arith.constant dense<0.000000e+00> : vector<16x128xf32>
    %97 = tpu.matmul %94, %96, %cst_48 {dimension_numbers = #tpu.dot_dimension_numbers<[1], [0], [0], [1], [0, 0, 1, 1], [], []>} : vector<16x64xbf16>, vector<64x128xbf16>, vector<16x128xf32> -> vector<16x128xf32>
    %98 = arith.addf %74, %97 : vector<16x128xf32>
    %99 = arith.addf %3, %98 : vector<16x128xf32>
    %100 = vector.broadcast %11 : vector<1x128xf32> to vector<16x128xf32>
    %101 = arith.addf %99, %100 : vector<16x128xf32>
    %cst_49 = arith.constant dense<0.000000e+00> : vector<16xf32>
    %102 = vector.multi_reduction <add>, %101, %cst_49 [1] : vector<16x128xf32> to vector<16xf32>
    %103 = vector.shape_cast %102 : vector<16xf32> to vector<16x1xf32>
    %cst_50 = arith.constant 1.280000e+02 : f32
    %104 = vector.broadcast %cst_50 : f32 to vector<16x1xf32>
    %105 = arith.divf %103, %104 : vector<16x1xf32>
    %106 = vector.broadcast %105 : vector<16x1xf32> to vector<16x128xf32>
    %107 = arith.subf %101, %106 : vector<16x128xf32>
    %108 = arith.mulf %107, %107 : vector<16x128xf32>
    %cst_51 = arith.constant dense<0.000000e+00> : vector<16xf32>
    %109 = vector.multi_reduction <add>, %108, %cst_51 [1] : vector<16x128xf32> to vector<16xf32>
    %110 = vector.shape_cast %109 : vector<16xf32> to vector<16x1xf32>
    %cst_52 = arith.constant 1.280000e+02 : f32
    %111 = vector.broadcast %cst_52 : f32 to vector<16x1xf32>
    %112 = arith.divf %110, %111 : vector<16x1xf32>
    %cst_53 = arith.constant 9.99999974E-6 : f32
    %113 = vector.broadcast %cst_53 : f32 to vector<16x1xf32>
    %114 = arith.addf %112, %113 : vector<16x1xf32>
    %115 = math.rsqrt %114 : vector<16x1xf32>
    %116 = vector.broadcast %115 : vector<16x1xf32> to vector<16x128xf32>
    %117 = arith.mulf %107, %116 : vector<16x128xf32>
    %118 = vector.broadcast %13 : vector<1x128xf32> to vector<16x128xf32>
    %119 = arith.mulf %117, %118 : vector<16x128xf32>
    %120 = vector.broadcast %15 : vector<1x128xf32> to vector<16x128xf32>
    %121 = arith.addf %119, %120 : vector<16x128xf32>
    %122 = arith.truncf %121 : vector<16x128xf32> to vector<16x128xbf16>
    %c0_54 = arith.constant 0 : index
    %c0_55 = arith.constant 0 : index
    %c0_56 = arith.constant 0 : index
    %123 = vector.load %arg9[%c0_54, %c0_55, %c0_56] : memref<1x128x512xbf16, #tpu.memory_space<vmem>>, vector<1x128x512xbf16>
    %124 = vector.shape_cast %123 : vector<1x128x512xbf16> to vector<128x512xbf16>
    %cst_57 = arith.constant dense<0.000000e+00> : vector<16x512xf32>
    %125 = tpu.matmul %122, %124, %cst_57 {dimension_numbers = #tpu.dot_dimension_numbers<[1], [0], [0], [1], [0, 0, 1, 1], [], []>} : vector<16x128xbf16>, vector<128x512xbf16>, vector<16x512xf32> -> vector<16x512xf32>
    %c0_58 = arith.constant 0 : index
    %c0_59 = arith.constant 0 : index
    %c0_60 = arith.constant 0 : index
    %126 = vector.load %arg10[%c0_58, %c0_59, %c0_60] : memref<1x1x512xf32, #tpu.memory_space<vmem>>, vector<1x1x512xf32>
    %127 = vector.shape_cast %126 : vector<1x1x512xf32> to vector<1x512xf32>
    %128 = vector.broadcast %127 : vector<1x512xf32> to vector<16x512xf32>
    %129 = arith.addf %125, %128 : vector<16x512xf32>
    %cst_61 = arith.constant 1.702000e+00 : f32
    %130 = vector.broadcast %cst_61 : f32 to vector<16x512xf32>
    %131 = arith.mulf %130, %129 : vector<16x512xf32>
    %132 = arith.negf %131 : vector<16x512xf32>
    %133 = math.exp %132 : vector<16x512xf32>
    %cst_62 = arith.constant 1.000000e+00 : f32
    %134 = vector.broadcast %cst_62 : f32 to vector<16x512xf32>
    %135 = arith.addf %134, %133 : vector<16x512xf32>
    %136 = arith.divf %134, %135 : vector<16x512xf32>
    %137 = arith.mulf %129, %136 : vector<16x512xf32>
    %138 = arith.truncf %137 : vector<16x512xf32> to vector<16x512xbf16>
    %c0_63 = arith.constant 0 : index
    %c0_64 = arith.constant 0 : index
    %c0_65 = arith.constant 0 : index
    %139 = vector.load %arg11[%c0_63, %c0_64, %c0_65] : memref<1x512x128xbf16, #tpu.memory_space<vmem>>, vector<1x512x128xbf16>
    %140 = vector.shape_cast %139 : vector<1x512x128xbf16> to vector<512x128xbf16>
    %cst_66 = arith.constant dense<0.000000e+00> : vector<16x128xf32>
    %141 = tpu.matmul %138, %140, %cst_66 {dimension_numbers = #tpu.dot_dimension_numbers<[1], [0], [0], [1], [0, 0, 1, 1], [], []>} : vector<16x512xbf16>, vector<512x128xbf16>, vector<16x128xf32> -> vector<16x128xf32>
    %142 = arith.addf %101, %141 : vector<16x128xf32>
    %143 = vector.broadcast %17 : vector<1x128xf32> to vector<16x128xf32>
    %144 = arith.addf %142, %143 : vector<16x128xf32>
    %c0_67 = arith.constant 0 : index
    %c0_68 = arith.constant 0 : index
    %145 = vector.load %arg13[%c0_67, %c0_68] : memref<16x128xf32, #tpu.memory_space<vmem>>, vector<16x128xf32>
    tpu.vector_store %arg13[%c0_67, %c0_68], %144 {strides = array<i32>} : memref<16x128xf32, #tpu.memory_space<vmem>>, vector<16x128xf32>,
    %c1_i32 = arith.constant 1 : i32
    %146 = arith.cmpi eq, %arg0, %c1_i32 : i32
    %147 = arith.extui %146 : i1 to i32
    %c0_i32_69 = arith.constant 0 : i32
    %148 = arith.cmpi ne, %147, %c0_i32_69 : i32
    scf.if %148 {
      %c2_70 = arith.constant 2 : index
      %c0_71 = arith.constant 0 : index
      %149 = vector.load %arg4[%c2_70, %c0_71] : memref<3x128xf32, #tpu.memory_space<vmem>>, vector<1x128xf32>
      %150 = vector.broadcast %149 : vector<1x128xf32> to vector<16x128xf32>
      %151 = arith.mulf %144, %150 : vector<16x128xf32>
      %c0_72 = arith.constant 0 : index
      %c0_73 = arith.constant 0 : index
      %152 = vector.load %arg12[%c0_72, %c0_73] : memref<16x128xf32, #tpu.memory_space<vmem>>, vector<16x128xf32>
      tpu.vector_store %arg12[%c0_72, %c0_73], %151 {strides = array<i32>} : memref<16x128xf32, #tpu.memory_space<vmem>>, vector<16x128xf32>,
    } else {
    }
    return
  }
  func.func @transform_0(%arg0: i32) -> (i32, i32) {
    %c0_i32 = arith.constant 0 : i32
    %c0_i32_0 = arith.constant 0 : i32
    %c0_i32_1 = arith.constant 0 : i32
    return %c0_i32, %c0_i32_0 : i32, i32
  }
  func.func @transform_1(%arg0: i32) -> (i32, i32) {
    %c0_i32 = arith.constant 0 : i32
    %c0_i32_0 = arith.constant 0 : i32
    %c0_i32_1 = arith.constant 0 : i32
    return %c0_i32, %c0_i32_0 : i32, i32
  }
  func.func @transform_2(%arg0: i32) -> (i32, i32) {
    %c0_i32 = arith.constant 0 : i32
    %c0_i32_0 = arith.constant 0 : i32
    %c0_i32_1 = arith.constant 0 : i32
    return %c0_i32, %c0_i32_0 : i32, i32
  }
  func.func @transform_3(%arg0: i32) -> (i32, i32) {
    %c0_i32 = arith.constant 0 : i32
    %c0_i32_0 = arith.constant 0 : i32
    %c0_i32_1 = arith.constant 0 : i32
    return %c0_i32, %c0_i32_0 : i32, i32
  }
  func.func @transform_4(%arg0: i32) -> (i32, i32, i32) {
    %c0_i32 = arith.constant 0 : i32
    %c0_i32_0 = arith.constant 0 : i32
    %c0_i32_1 = arith.constant 0 : i32
    return %arg0, %c0_i32, %c0_i32_0 : i32, i32, i32
  }
  func.func @transform_5(%arg0: i32) -> (i32, i32, i32) {
    %c0_i32 = arith.constant 0 : i32
    %c0_i32_0 = arith.constant 0 : i32
    %c0_i32_1 = arith.constant 0 : i32
    return %arg0, %c0_i32, %c0_i32_0 : i32, i32, i32
  }
  func.func @transform_6(%arg0: i32) -> (i32, i32, i32) {
    %c0_i32 = arith.constant 0 : i32
    %c0_i32_0 = arith.constant 0 : i32
    %c0_i32_1 = arith.constant 0 : i32
    return %arg0, %c0_i32, %c0_i32_0 : i32, i32, i32
  }
  func.func @transform_7(%arg0: i32) -> (i32, i32, i32) {
    %c0_i32 = arith.constant 0 : i32
    %c0_i32_0 = arith.constant 0 : i32
    %c0_i32_1 = arith.constant 0 : i32
    return %arg0, %c0_i32, %c0_i32_0 : i32, i32, i32
  }
  func.func @transform_8(%arg0: i32) -> (i32, i32, i32) {
    %c0_i32 = arith.constant 0 : i32
    %c0_i32_0 = arith.constant 0 : i32
    %c0_i32_1 = arith.constant 0 : i32
    return %arg0, %c0_i32, %c0_i32_0 : i32, i32, i32
  }
  func.func @transform_9(%arg0: i32) -> (i32, i32, i32) {
    %c0_i32 = arith.constant 0 : i32
    %c0_i32_0 = arith.constant 0 : i32
    %c0_i32_1 = arith.constant 0 : i32
    return %arg0, %c0_i32, %c0_i32_0 : i32, i32, i32
  }
  func.func @transform_10(%arg0: i32) -> (i32, i32, i32) {
    %c0_i32 = arith.constant 0 : i32
    %c0_i32_0 = arith.constant 0 : i32
    %c0_i32_1 = arith.constant 0 : i32
    return %arg0, %c0_i32, %c0_i32_0 : i32, i32, i32
  }
  func.func @transform_11(%arg0: i32) -> (i32, i32) {
    %c0_i32 = arith.constant 0 : i32
    %c0_i32_0 = arith.constant 0 : i32
    %c0_i32_1 = arith.constant 0 : i32
    return %c0_i32, %c0_i32_0 : i32, i32
  }
}

</mosaic_0001>

<llo_original>
// kernel: tpu_custom_call.1
$region0: #{tpu_custom_call.1}
  #allocation0 [shape = 'u32[]', space=smem, size = 0x4, offset = 0x4, fixed_abs, tag = 'smem constant byte address 0x4 - core index']
  #allocation1 [shape = 'u32[72,128]{1,0:T(1,128)}', space=vmem, size = 0x9000, scoped, tag = 'internal scratch']
  #allocation2 [shape = 'f32[16,128]{1,0:T(8,128)}', space=vmem, size = 0x2000, scoped, tag = 'scratch operand']
  #allocation3 [shape = 'bf16[32,128]{1,0:T(8,128)(2,1)}', space=vmem, size = 0x2000, scoped, tag = 'scratch operand']
  %s0 = inlined_call_operand.hbm [shape: f32[16,128], index: 0, kind: input, shape index: {}]
  %s1 = inlined_call_operand.hbm [shape: f32[32,128], index: 1, kind: input, shape index: {}]
  %s2 = inlined_call_operand.hbm [shape: f32[16,32], index: 2, kind: input, shape index: {}]
  %s3 = inlined_call_operand.hbm [shape: f32[3,128], index: 3, kind: input, shape index: {}]
  %s4 = inlined_call_operand.hbm [shape: f32[2,8,128], index: 4, kind: input, shape index: {}]
  %s5 = inlined_call_operand.hbm [shape: bf16[2,128,128], index: 5, kind: input, shape index: {}]
  %s6 = inlined_call_operand.hbm [shape: bf16[2,128,256], index: 6, kind: input, shape index: {}]
  %s7 = inlined_call_operand.hbm [shape: bf16[2,128,128], index: 7, kind: input, shape index: {}]
  %s8 = inlined_call_operand.hbm [shape: bf16[2,128,512], index: 8, kind: input, shape index: {}]
  %s9 = inlined_call_operand.vmem [shape: f32[2,1,512], index: 9, kind: input, shape index: {}]
  %s10 = inlined_call_operand.hbm [shape: bf16[2,512,128], index: 10, kind: input, shape index: {}]
  %s11 = inlined_call_operand.hbm [shape: f32[16,128], index: 11, kind: output, shape index: {}]
  %s12 = sld [smem:[#allocation0]]
  $region125: #{tpu_custom_call.1} parent=0
    _
  %s14 = ssub.s32 1, %s12
  %s15 = scalar_select 0, %s14, %s12
  $region1: #{tpu_custom_call.1} parent=0
    #allocation4 [shape = 'u8[8192]{0}', space=vmem, size = 0x2000, scoped, tag = 'input window, operand 0, single buffered']
    #allocation5 [shape = 's32[2]{0}', space=sflag, size = 0x8, scoped, tag = 'scoped memory for tpu_custom_call.1']
    #allocation6 [shape = 's32[2]{0}', space=sflag, size = 0x8, scoped, tag = 'scoped memory for tpu_custom_call.1']
    #allocation7 [shape = 'u8[16384]{0}', space=vmem, size = 0x4000, scoped, tag = 'input window, operand 1, single buffered']
    #allocation8 [shape = 's32[1]{0}', space=sflag, size = 0x4, scoped, tag = 'scoped memory for tpu_custom_call.1']
    #allocation9 [shape = 'u8[8192]{0}', space=vmem, size = 0x2000, scoped, tag = 'input window, operand 2, single buffered']
    #allocation10 [shape = 'u8[2048]{0}', space=vmem, size = 0x800, scoped, tag = 'input window, operand 3, single buffered']
    #allocation11 [shape = 's32[1]{0}', space=sflag, size = 0x4, scoped, tag = 'scoped memory for tpu_custom_call.1']
    #allocation12 [shape = 'u8[8192]{0}', space=vmem, size = 0x2000, scoped, tag = 'input window, operand 4']
    #allocation13 [shape = 'u8[65536]{0}', space=vmem, size = 0x10000, scoped, tag = 'input window, operand 5']
    #allocation14 [shape = 'u8[131072]{0}', space=vmem, size = 0x20000, scoped, tag = 'input window, operand 6']
    #allocation15 [shape = 'u8[65536]{0}', space=vmem, size = 0x10000, scoped, tag = 'input window, operand 7']
    #allocation16 [shape = 'u8[262144]{0}', space=vmem, size = 0x40000, scoped, tag = 'input window, operand 8']
    #allocation17 [shape = 'u8[262144]{0}', space=vmem, size = 0x40000, scoped, tag = 'input window, operand 10']
    #allocation18 [shape = 'u8[8192]{0}', space=vmem, size = 0x2000, scoped, tag = 'output window, operand 0, single buffered']
    %16 = vsyncpa [#allocation5], 0
    %17 = vsyncpa [#allocation8], 0
    %18 = vsyncpa [#allocation11], 0
    %19 = vsyncpa [#allocation6], 0
    loop: start=0, step=1, limit=4
    $region2: #{tpu_custom_call.1} parent=1 // loop_pre_header
      _
    $region3: #{tpu_custom_call.1} parent=1 // loop_header
      %s21 = sphi 0, %s25
      %p22 = scmp.ge.s32.totalorder %s21, 4
      %s29 = sphi 0, %s29
      %s31 = sphi 0, %s29
      %s32 = sphi 0, %s31
      %s46 = sphi 0, %s32
      %s50 = sphi 0, %s50
      %s52 = sphi 0, %s50
      %s53 = sphi 0, %s52
      %s67 = sphi 0, %s53
      %s71 = sphi 0, %s71
      %s73 = sphi 0, %s71
      %s74 = sphi 0, %s73
      %s88 = sphi 0, %s74
      %s92 = sphi 0, %s92
      %s94 = sphi 0, %s92
      %s95 = sphi 0, %s94
      %s109 = sphi 0, %s95
      %s115 = sphi 0, %s117
      %s118 = sphi 0, %s115
      %s119 = sphi 0, %s118
      %s135 = sphi 0, %s119
      %s141 = sphi 0, %s143
      %s144 = sphi 0, %s141
      %s145 = sphi 0, %s144
      %s161 = sphi 0, %s145
      %s167 = sphi 0, %s169
      %s170 = sphi 0, %s167
      %s171 = sphi 0, %s170
      %s187 = sphi 0, %s171
      %s193 = sphi 0, %s195
      %s196 = sphi 0, %s193
      %s197 = sphi 0, %s196
      %s213 = sphi 0, %s197
      %s219 = sphi 0, %s221
      %s222 = sphi 0, %s219
      %s223 = sphi 0, %s222
      %s239 = sphi 0, %s223
      %s245 = sphi 0, %s247
      %s248 = sphi 0, %s245
      %s249 = sphi 0, %s248
      %s265 = sphi 0, %s249
      %s271 = sphi 0, %s273
      %s274 = sphi 0, %s271
      %s275 = sphi 0, %s274
      %s291 = sphi 0, %s275
      %s295 = sphi 0, %s295
      %s297 = sphi 0, %s295
      %s298 = sphi 0, %s297
      %s312 = sphi 0, %s298
    $region4: #{tpu_custom_call.1} parent=1 // loop_header_branch
      %24 = sbr.rel (%p22) target = $region8
    $region5: #{tpu_custom_call.1} parent=1 // loop_body
      %s26 = ssub.s32 %s21, 1
      %s27 = ssub.s32 %s21, 2
      %s28 = sadd.s32 %s21, 1
      %s30 = sadd.s32 %s29, 1
      %p33 = scmp.eq.s32.totalorder %s21, 1
      %p34 = scmp.ne.s32.totalorder %s29, %s31
      %p35 = scmp.eq.s32.totalorder %s21, 0
      %p36 = por %p34, %p35
      %p37 = scmp.ne.s32.totalorder %s29, %s31
      %p38 = scmp.eq.s32.totalorder %s26, 1
      %p39 = por %p37, %p38
      %p40 = scmp.ne.s32.totalorder %s31, %s32
      %p41 = scmp.eq.s32.totalorder %s26, 0
      %p42 = por %p40, %p41
      %p43 = scmp.ne.s32.totalorder %s31, %s32
      %p44 = scmp.eq.s32.totalorder %s27, 1
      %p45 = por %p43, %p44
      %p47 = scmp.ne.s32.totalorder %s32, %s46
      %p48 = scmp.eq.s32.totalorder %s27, 0
      %p49 = por %p47, %p48
      %s51 = sadd.s32 %s50, 1
      %p54 = scmp.eq.s32.totalorder %s21, 1
      %p55 = scmp.ne.s32.totalorder %s50, %s52
      %p56 = scmp.eq.s32.totalorder %s21, 0
      %p57 = por %p55, %p56
      %p58 = scmp.ne.s32.totalorder %s50, %s52
      %p59 = scmp.eq.s32.totalorder %s26, 1
      %p60 = por %p58, %p59
      %p61 = scmp.ne.s32.totalorder %s52, %s53
      %p62 = scmp.eq.s32.totalorder %s26, 0
      %p63 = por %p61, %p62
      %p64 = scmp.ne.s32.totalorder %s52, %s53
      %p65 = scmp.eq.s32.totalorder %s27, 1
      %p66 = por %p64, %p65
      %p68 = scmp.ne.s32.totalorder %s53, %s67
      %p69 = scmp.eq.s32.totalorder %s27, 0
      %p70 = por %p68, %p69
      %s72 = sadd.s32 %s71, 1
      %p75 = scmp.eq.s32.totalorder %s21, 1
      %p76 = scmp.ne.s32.totalorder %s71, %s73
      %p77 = scmp.eq.s32.totalorder %s21, 0
      %p78 = por %p76, %p77
      %p79 = scmp.ne.s32.totalorder %s71, %s73
      %p80 = scmp.eq.s32.totalorder %s26, 1
      %p81 = por %p79, %p80
      %p82 = scmp.ne.s32.totalorder %s73, %s74
      %p83 = scmp.eq.s32.totalorder %s26, 0
      %p84 = por %p82, %p83
      %p85 = scmp.ne.s32.totalorder %s73, %s74
      %p86 = scmp.eq.s32.totalorder %s27, 1
      %p87 = por %p85, %p86
      %p89 = scmp.ne.s32.totalorder %s74, %s88
      %p90 = scmp.eq.s32.totalorder %s27, 0
      %p91 = por %p89, %p90
      %s93 = sadd.s32 %s92, 1
      %p96 = scmp.eq.s32.totalorder %s21, 1
      %p97 = scmp.ne.s32.totalorder %s92, %s94
      %p98 = scmp.eq.s32.totalorder %s21, 0
      %p99 = por %p97, %p98
      %p100 = scmp.ne.s32.totalorder %s92, %s94
      %p101 = scmp.eq.s32.totalorder %s26, 1
      %p102 = por %p100, %p101
      %p103 = scmp.ne.s32.totalorder %s94, %s95
      %p104 = scmp.eq.s32.totalorder %s26, 0
      %p105 = por %p103, %p104
      %p106 = scmp.ne.s32.totalorder %s94, %s95
      %p107 = scmp.eq.s32.totalorder %s27, 1
      %p108 = por %p106, %p107
      %p110 = scmp.ne.s32.totalorder %s95, %s109
      %p111 = scmp.eq.s32.totalorder %s27, 0
      %p112 = por %p110, %p111
      %s113 = ssub.s32 %s21, %s28
      %p114 = scmp.eq.s32.totalorder %s113, 0
      %s116 = sadd.s32 %s115, 1
      %s117 = scalar_select %p114, %s115, %s116
      %p120 = pneg %p114
      %p121 = scmp.eq.s32.totalorder %s21, 1
      %p122 = por %p120, %p121
      %p123 = scmp.ne.s32.totalorder %s115, %s118
      %p124 = scmp.eq.s32.totalorder %s21, 0
      %p125 = por %p123, %p124
      %p126 = scmp.ne.s32.totalorder %s115, %s118
      %p127 = scmp.eq.s32.totalorder %s26, 1
      %p128 = por %p126, %p127
      %p129 = scmp.ne.s32.totalorder %s118, %s119
      %p130 = scmp.eq.s32.totalorder %s26, 0
      %p131 = por %p129, %p130
      %p132 = scmp.ne.s32.totalorder %s118, %s119
      %p133 = scmp.eq.s32.totalorder %s27, 1
      %p134 = por %p132, %p133
      %p136 = scmp.ne.s32.totalorder %s119, %s135
      %p137 = scmp.eq.s32.totalorder %s27, 0
      %p138 = por %p136, %p137
      %s139 = ssub.s32 %s21, %s28
      %p140 = scmp.eq.s32.totalorder %s139, 0
      %s142 = sadd.s32 %s141, 1
      %s143 = scalar_select %p140, %s141, %s142
      %p146 = pneg %p140
      %p147 = scmp.eq.s32.totalorder %s21, 1
      %p148 = por %p146, %p147
      %p149 = scmp.ne.s32.totalorder %s141, %s144
      %p150 = scmp.eq.s32.totalorder %s21, 0
      %p151 = por %p149, %p150
      %p152 = scmp.ne.s32.totalorder %s141, %s144
      %p153 = scmp.eq.s32.totalorder %s26, 1
      %p154 = por %p152, %p153
      %p155 = scmp.ne.s32.totalorder %s144, %s145
      %p156 = scmp.eq.s32.totalorder %s26, 0
      %p157 = por %p155, %p156
      %p158 = scmp.ne.s32.totalorder %s144, %s145
      %p159 = scmp.eq.s32.totalorder %s27, 1
      %p160 = por %p158, %p159
      %p162 = scmp.ne.s32.totalorder %s145, %s161
      %p163 = scmp.eq.s32.totalorder %s27, 0
      %p164 = por %p162, %p163
      %s165 = ssub.s32 %s21, %s28
      %p166 = scmp.eq.s32.totalorder %s165, 0
      %s168 = sadd.s32 %s167, 1
      %s169 = scalar_select %p166, %s167, %s168
      %p172 = pneg %p166
      %p173 = scmp.eq.s32.totalorder %s21, 1
      %p174 = por %p172, %p173
      %p175 = scmp.ne.s32.totalorder %s167, %s170
      %p176 = scmp.eq.s32.totalorder %s21, 0
      %p177 = por %p175, %p176
      %p178 = scmp.ne.s32.totalorder %s167, %s170
      %p179 = scmp.eq.s32.totalorder %s26, 1
      %p180 = por %p178, %p179
      %p181 = scmp.ne.s32.totalorder %s170, %s171
      %p182 = scmp.eq.s32.totalorder %s26, 0
      %p183 = por %p181, %p182
      %p184 = scmp.ne.s32.totalorder %s170, %s171
      %p185 = scmp.eq.s32.totalorder %s27, 1
      %p186 = por %p184, %p185
      %p188 = scmp.ne.s32.totalorder %s171, %s187
      %p189 = scmp.eq.s32.totalorder %s27, 0
      %p190 = por %p188, %p189
      %s191 = ssub.s32 %s21, %s28
      %p192 = scmp.eq.s32.totalorder %s191, 0
      %s194 = sadd.s32 %s193, 1
      %s195 = scalar_select %p192, %s193, %s194
      %p198 = pneg %p192
      %p199 = scmp.eq.s32.totalorder %s21, 1
      %p200 = por %p198, %p199
      %p201 = scmp.ne.s32.totalorder %s193, %s196
      %p202 = scmp.eq.s32.totalorder %s21, 0
      %p203 = por %p201, %p202
      %p204 = scmp.ne.s32.totalorder %s193, %s196
      %p205 = scmp.eq.s32.totalorder %s26, 1
      %p206 = por %p204, %p205
      %p207 = scmp.ne.s32.totalorder %s196, %s197
      %p208 = scmp.eq.s32.totalorder %s26, 0
      %p209 = por %p207, %p208
      %p210 = scmp.ne.s32.totalorder %s196, %s197
      %p211 = scmp.eq.s32.totalorder %s27, 1
      %p212 = por %p210, %p211
      %p214 = scmp.ne.s32.totalorder %s197, %s213
      %p215 = scmp.eq.s32.totalorder %s27, 0
      %p216 = por %p214, %p215
      %s217 = ssub.s32 %s21, %s28
      %p218 = scmp.eq.s32.totalorder %s217, 0
      %s220 = sadd.s32 %s219, 1
      %s221 = scalar_select %p218, %s219, %s220
      %p224 = pneg %p218
      %p225 = scmp.eq.s32.totalorder %s21, 1
      %p226 = por %p224, %p225
      %p227 = scmp.ne.s32.totalorder %s219, %s222
      %p228 = scmp.eq.s32.totalorder %s21, 0
      %p229 = por %p227, %p228
      %p230 = scmp.ne.s32.totalorder %s219, %s222
      %p231 = scmp.eq.s32.totalorder %s26, 1
      %p232 = por %p230, %p231
      %p233 = scmp.ne.s32.totalorder %s222, %s223
      %p234 = scmp.eq.s32.totalorder %s26, 0
      %p235 = por %p233, %p234
      %p236 = scmp.ne.s32.totalorder %s222, %s223
      %p237 = scmp.eq.s32.totalorder %s27, 1
      %p238 = por %p236, %p237
      %p240 = scmp.ne.s32.totalorder %s223, %s239
      %p241 = scmp.eq.s32.totalorder %s27, 0
      %p242 = por %p240, %p241
      %s243 = ssub.s32 %s21, %s28
      %p244 = scmp.eq.s32.totalorder %s243, 0
      %s246 = sadd.s32 %s245, 1
      %s247 = scalar_select %p244, %s245, %s246
      %p250 = pneg %p244
      %p251 = scmp.eq.s32.totalorder %s21, 1
      %p252 = por %p250, %p251
      %p253 = scmp.ne.s32.totalorder %s245, %s248
      %p254 = scmp.eq.s32.totalorder %s21, 0
      %p255 = por %p253, %p254
      %p256 = scmp.ne.s32.totalorder %s245, %s248
      %p257 = scmp.eq.s32.totalorder %s26, 1
      %p258 = por %p256, %p257
      %p259 = scmp.ne.s32.totalorder %s248, %s249
      %p260 = scmp.eq.s32.totalorder %s26, 0
      %p261 = por %p259, %p260
      %p262 = scmp.ne.s32.totalorder %s248, %s249
      %p263 = scmp.eq.s32.totalorder %s27, 1
      %p264 = por %p262, %p263
      %p266 = scmp.ne.s32.totalorder %s249, %s265
      %p267 = scmp.eq.s32.totalorder %s27, 0
      %p268 = por %p266, %p267
      %s269 = ssub.s32 %s21, %s28
      %p270 = scmp.eq.s32.totalorder %s269, 0
      %s272 = sadd.s32 %s271, 1
      %s273 = scalar_select %p270, %s271, %s272
      %p276 = pneg %p270
      %p277 = scmp.eq.s32.totalorder %s21, 1
      %p278 = por %p276, %p277
      %p279 = scmp.ne.s32.totalorder %s271, %s274
      %p280 = scmp.eq.s32.totalorder %s21, 0
      %p281 = por %p279, %p280
      %p282 = scmp.ne.s32.totalorder %s271, %s274
      %p283 = scmp.eq.s32.totalorder %s26, 1
      %p284 = por %p282, %p283
      %p285 = scmp.ne.s32.totalorder %s274, %s275
      %p286 = scmp.eq.s32.totalorder %s26, 0
      %p287 = por %p285, %p286
      %p288 = scmp.ne.s32.totalorder %s274, %s275
      %p289 = scmp.eq.s32.totalorder %s27, 1
      %p290 = por %p288, %p289
      %p292 = scmp.ne.s32.totalorder %s275, %s291
      %p293 = scmp.eq.s32.totalorder %s27, 0
      %p294 = por %p292, %p293
      %s296 = sadd.s32 %s295, 1
      %p299 = scmp.eq.s32.totalorder %s21, 1
      %p300 = scmp.ne.s32.totalorder %s295, %s297
      %p301 = scmp.eq.s32.totalorder %s21, 0
      %p302 = por %p300, %p301
      %p303 = scmp.ne.s32.totalorder %s295, %s297
      %p304 = scmp.eq.s32.totalorder %s26, 1
      %p305 = por %p303, %p304
      %p306 = scmp.ne.s32.totalorder %s297, %s298
      %p307 = scmp.eq.s32.totalorder %s26, 0
      %p308 = por %p306, %p307
      %p309 = scmp.ne.s32.totalorder %s297, %s298
      %p310 = scmp.eq.s32.totalorder %s27, 1
      %p311 = por %p309, %p310
      %p313 = scmp.ne.s32.totalorder %s298, %s312
      %p314 = scmp.eq.s32.totalorder %s27, 0
      %p315 = por %p313, %p314
      %p316 = scmp.le.s32.totalorder 1, %s21
      %p317 = scmp.lt.s32.totalorder %s21, 3
      %p318 = pnand %p316, %p317
      %p319 = pneg %p318
      // Predicated region
      $region9: #{tpu_custom_call.1} parent=5 // pred_check
        _
      $region10: #{tpu_custom_call.1} parent=5 // pred_check_branch
        %321 = sbr.rel (%p318) target = $region12
      $region11: #{tpu_custom_call.1} parent=5 // pred_region
        %s322 = ssub.s32 %s21, 1
        // Predicated region
        $region13: #{tpu_custom_call.1} parent=11 // pred_check
          %p323 = pneg %p42
        $region14: #{tpu_custom_call.1} parent=11 // pred_check_branch
          %325 = sbr.rel (%p323) target = $region16
        $region15: #{tpu_custom_call.1} parent=11 // pred_region
          %327 = vsyncadd [#allocation5], 0
          %s328 = sshll.u32 %s0, 4
          %s329 = int_to_ptr.hbm [resolvable:$true] %s328
          %s330 = sshll.u32 [#allocation4], 4
          %s331 = int_to_ptr.vmem [resolvable:$true] %s330
          %336 = dma.hbm_to_vmem [thread:$0]  %s329, 256, %s331, [#allocation5], 128, 128, 8
        $region16: #{tpu_custom_call.1} parent=11 // pred_fallthru
          _
        // Predicated region
        $region17: #{tpu_custom_call.1} parent=11 // pred_check
          %p337 = pneg %p63
        $region18: #{tpu_custom_call.1} parent=11 // pred_check_branch
          %339 = sbr.rel (%p337) target = $region20
        $region19: #{tpu_custom_call.1} parent=11 // pred_region
          %341 = vsyncadd [#allocation8], 0
          %s342 = sshll.u32 %s1, 4
          %s343 = int_to_ptr.hbm [resolvable:$true] %s342
          %s344 = sshll.u32 [#allocation7], 4
          %s345 = int_to_ptr.vmem [resolvable:$true] %s344
          %350 = dma.hbm_to_vmem [thread:$0]  %s343, 512, %s345, [#allocation8], 128, 128, 8
        $region20: #{tpu_custom_call.1} parent=11 // pred_fallthru
          _
        // Predicated region
        $region21: #{tpu_custom_call.1} parent=11 // pred_check
          %p351 = pneg %p84
        $region22: #{tpu_custom_call.1} parent=11 // pred_check_branch
          %353 = sbr.rel (%p351) target = $region24
        $region23: #{tpu_custom_call.1} parent=11 // pred_region
          %355 = vsyncadd [#allocation8], 0
          %s356 = sshll.u32 %s2, 4
          %s357 = int_to_ptr.hbm [resolvable:$true] %s356
          %s358 = sshll.u32 [#allocation9], 4
          %s359 = int_to_ptr.vmem [resolvable:$true] %s358
          %364 = dma.hbm_to_vmem [thread:$0]  %s357, 256, %s359, [#allocation8], 128, 128, 8
        $region24: #{tpu_custom_call.1} parent=11 // pred_fallthru
          _
        // Predicated region
        $region25: #{tpu_custom_call.1} parent=11 // pred_check
          %p365 = pneg %p105
        $region26: #{tpu_custom_call.1} parent=11 // pred_check_branch
          %367 = sbr.rel (%p365) target = $region28
        $region27: #{tpu_custom_call.1} parent=11 // pred_region
          %369 = vsyncadd [#allocation11], 0
          %s371 = sshll.u32 %s3, 4
          %s372 = int_to_ptr.hbm [resolvable:$true] %s371
          %s373 = sshll.u32 [#allocation10], 4
          %s374 = int_to_ptr.vmem [resolvable:$true] %s373
          %376 = dma.hbm_to_vmem [thread:$0]  %s372, 64, %s374, [#allocation11]
        $region28: #{tpu_custom_call.1} parent=11 // pred_fallthru
          _
      $region12: #{tpu_custom_call.1} parent=5 // pred_fallthru
        _
      %p377 = scmp.lt.s32.totalorder %s21, 2
      // Predicated region
      $region29: #{tpu_custom_call.1} parent=5 // pred_check
        %p378 = pneg %p377
      $region30: #{tpu_custom_call.1} parent=5 // pred_check_branch
        %380 = sbr.rel (%p378) target = $region32
      $region31: #{tpu_custom_call.1} parent=5 // pred_region
        // Predicated region
        $region33: #{tpu_custom_call.1} parent=31 // pred_check
          %p381 = pneg %p125
        $region34: #{tpu_custom_call.1} parent=31 // pred_check_branch
          %383 = sbr.rel (%p381) target = $region36
        $region35: #{tpu_custom_call.1} parent=31 // pred_region
          %s384 = sand.u32 %s21, 1
          %s385 = scalar_lea.sflag [#allocation5], %s384
          %s386 = sand.u32 %s115, 1
          %s387 = smul.addr %s386, 8
          %s388 = scalar_lea.vmem [#allocation12], %s387
          %390 = vsyncadd %s385, 0
          %s391 = smul.addr %s21, 8
          %s392 = scalar_lea.hbm %s4, %s391
          %s394 = sshll.u32 %s392, 4
          %s395 = int_to_ptr.hbm [resolvable:$true] %s394
          %s396 = sshll.u32 %s388, 4
          %s397 = int_to_ptr.vmem [resolvable:$true] %s396
          %399 = dma.hbm_to_vmem [thread:$0]  %s395, 128, %s397, %s385
        $region36: #{tpu_custom_call.1} parent=31 // pred_fallthru
          _
        // Predicated region
        $region37: #{tpu_custom_call.1} parent=31 // pred_check
          %p400 = pneg %p151
        $region38: #{tpu_custom_call.1} parent=31 // pred_check_branch
          %402 = sbr.rel (%p400) target = $region40
        $region39: #{tpu_custom_call.1} parent=31 // pred_region
          %s403 = sand.u32 %s21, 1
          %s404 = scalar_lea.sflag [#allocation5], %s403
          %s405 = sand.u32 %s141, 1
          %s406 = smul.addr %s405, 64
          %s407 = scalar_lea.vmem [#allocation13], %s406
          %409 = vsyncadd %s404, 0
          %s410 = smul.addr %s21, 16
          %s411 = smul.addr %s410, 4
          %s412 = scalar_lea.hbm %s5, %s411
          %s413 = sshll.u32 %s412, 4
          %s414 = int_to_ptr.hbm [resolvable:$true] %s413
          %s415 = sshll.u32 %s407, 4
          %s416 = int_to_ptr.vmem [resolvable:$true] %s415
          %421 = dma.hbm_to_vmem [thread:$0]  %s414, 1024, %s416, %s404, 64, 64, 4
        $region40: #{tpu_custom_call.1} parent=31 // pred_fallthru
          _
        // Predicated region
        $region41: #{tpu_custom_call.1} parent=31 // pred_check
          %p422 = pneg %p177
        $region42: #{tpu_custom_call.1} parent=31 // pred_check_branch
          %424 = sbr.rel (%p422) target = $region44
        $region43: #{tpu_custom_call.1} parent=31 // pred_region
          %s425 = sand.u32 %s21, 1
          %s426 = scalar_lea.sflag [#allocation5], %s425
          %s427 = sand.u32 %s167, 1
          %s428 = smul.addr %s427, 128
          %s429 = scalar_lea.vmem [#allocation14], %s428
          %431 = vsyncadd %s426, 0
          %s432 = smul.addr %s21, 32
          %s433 = smul.addr %s432, 4
          %s434 = scalar_lea.hbm %s6, %s433
          %s435 = sshll.u32 %s434, 4
          %s436 = int_to_ptr.hbm [resolvable:$true] %s435
          %s437 = sshll.u32 %s429, 4
          %s438 = int_to_ptr.vmem [resolvable:$true] %s437
          %443 = dma.hbm_to_vmem [thread:$0]  %s436, 2048, %s438, %s426, 128, 128, 8
        $region44: #{tpu_custom_call.1} parent=31 // pred_fallthru
          _
        // Predicated region
        $region45: #{tpu_custom_call.1} parent=31 // pred_check
          %p444 = pneg %p203
        $region46: #{tpu_custom_call.1} parent=31 // pred_check_branch
          %446 = sbr.rel (%p444) target = $region48
        $region47: #{tpu_custom_call.1} parent=31 // pred_region
          %s447 = sand.u32 %s21, 1
          %s448 = scalar_lea.sflag [#allocation5], %s447
          %s449 = sand.u32 %s193, 1
          %s450 = smul.addr %s449, 64
          %s451 = scalar_lea.vmem [#allocation15], %s450
          %453 = vsyncadd %s448, 0
          %s454 = smul.addr %s21, 16
          %s455 = smul.addr %s454, 4
          %s456 = scalar_lea.hbm %s7, %s455
          %s457 = sshll.u32 %s456, 4
          %s458 = int_to_ptr.hbm [resolvable:$true] %s457
          %s459 = sshll.u32 %s451, 4
          %s460 = int_to_ptr.vmem [resolvable:$true] %s459
          %465 = dma.hbm_to_vmem [thread:$0]  %s458, 1024, %s460, %s448, 64, 64, 4
        $region48: #{tpu_custom_call.1} parent=31 // pred_fallthru
          _
        // Predicated region
        $region49: #{tpu_custom_call.1} parent=31 // pred_check
          %p466 = pneg %p229
        $region50: #{tpu_custom_call.1} parent=31 // pred_check_branch
          %468 = sbr.rel (%p466) target = $region52
        $region51: #{tpu_custom_call.1} parent=31 // pred_region
          %s469 = sand.u32 %s21, 1
          %s470 = scalar_lea.sflag [#allocation5], %s469
          %s471 = sand.u32 %s219, 1
          %s472 = smul.addr %s471, 256
          %s473 = scalar_lea.vmem [#allocation16], %s472
          %475 = vsyncadd %s470, 0
          %s476 = smul.addr %s21, 64
          %s477 = smul.addr %s476, 4
          %s478 = scalar_lea.hbm %s8, %s477
          %s479 = sshll.u32 %s478, 4
          %s480 = int_to_ptr.hbm [resolvable:$true] %s479
          %s481 = sshll.u32 %s473, 4
          %s482 = int_to_ptr.vmem [resolvable:$true] %s481
          %487 = dma.hbm_to_vmem [thread:$0]  %s480, 4096, %s482, %s470, 256, 256, 16
        $region52: #{tpu_custom_call.1} parent=31 // pred_fallthru
          _
        // Predicated region
        $region53: #{tpu_custom_call.1} parent=31 // pred_check
          %p488 = pneg %p255
        $region54: #{tpu_custom_call.1} parent=31 // pred_check_branch
          %490 = sbr.rel (%p488) target = $region56
        $region55: #{tpu_custom_call.1} parent=31 // pred_region
          %p491 = scmp.lt.s32.totalorder %s21, 1
          %s492 = scalar_select %p491, %s21, 1
          %s493 = smul.addr %s492, 4
          %s494 = scalar_lea.vmem %s9, %s493
        $region56: #{tpu_custom_call.1} parent=31 // pred_fallthru
          _
        // Predicated region
        $region57: #{tpu_custom_call.1} parent=31 // pred_check
          %p495 = pneg %p281
        $region58: #{tpu_custom_call.1} parent=31 // pred_check_branch
          %497 = sbr.rel (%p495) target = $region60
        $region59: #{tpu_custom_call.1} parent=31 // pred_region
          %s498 = sand.u32 %s21, 1
          %s499 = scalar_lea.sflag [#allocation5], %s498
          %s500 = sand.u32 %s271, 1
          %s501 = smul.addr %s500, 256
          %s502 = scalar_lea.vmem [#allocation17], %s501
          %504 = vsyncadd %s499, 0
          %s505 = smul.addr %s21, 64
          %s506 = smul.addr %s505, 4
          %s507 = scalar_lea.hbm %s10, %s506
          %s508 = sshll.u32 %s507, 4
          %s509 = int_to_ptr.hbm [resolvable:$true] %s508
          %s510 = sshll.u32 %s502, 4
          %s511 = int_to_ptr.vmem [resolvable:$true] %s510
          %516 = dma.hbm_to_vmem [thread:$0]  %s509, 4096, %s511, %s499, 64, 64, 4
        $region60: #{tpu_custom_call.1} parent=31 // pred_fallthru
          _
      $region32: #{tpu_custom_call.1} parent=5 // pred_fallthru
        _
      %p517 = scmp.le.s32.totalorder 1, %s21
      %p518 = scmp.lt.s32.totalorder %s21, 3
      %p519 = pnand %p517, %p518
      %p520 = pneg %p519
      // Predicated region
      $region61: #{tpu_custom_call.1} parent=5 // pred_check
        _
      $region62: #{tpu_custom_call.1} parent=5 // pred_check_branch
        %522 = sbr.rel (%p519) target = $region64
      $region63: #{tpu_custom_call.1} parent=5 // pred_region
        %s523 = ssub.s32 %s21, 1
        // Predicated region
        $region65: #{tpu_custom_call.1} parent=63 // pred_check
          %p524 = pneg %p42
        $region66: #{tpu_custom_call.1} parent=63 // pred_check_branch
          %526 = sbr.rel (%p524) target = $region68
        $region67: #{tpu_custom_call.1} parent=63 // pred_region
          %528 = dma.done [#allocation5], 256
        $region68: #{tpu_custom_call.1} parent=63 // pred_fallthru
          _
        // Predicated region
        $region69: #{tpu_custom_call.1} parent=63 // pred_check
          %p529 = pneg %p63
        $region70: #{tpu_custom_call.1} parent=63 // pred_check_branch
          %531 = sbr.rel (%p529) target = $region72
        $region71: #{tpu_custom_call.1} parent=63 // pred_region
          %533 = dma.done [#allocation8], 512
        $region72: #{tpu_custom_call.1} parent=63 // pred_fallthru
          _
        // Predicated region
        $region73: #{tpu_custom_call.1} parent=63 // pred_check
          %p534 = pneg %p84
        $region74: #{tpu_custom_call.1} parent=63 // pred_check_branch
          %536 = sbr.rel (%p534) target = $region76
        $region75: #{tpu_custom_call.1} parent=63 // pred_region
          %538 = dma.done [#allocation8], 256
        $region76: #{tpu_custom_call.1} parent=63 // pred_fallthru
          _
        // Predicated region
        $region77: #{tpu_custom_call.1} parent=63 // pred_check
          %p539 = pneg %p105
        $region78: #{tpu_custom_call.1} parent=63 // pred_check_branch
          %541 = sbr.rel (%p539) target = $region80
        $region79: #{tpu_custom_call.1} parent=63 // pred_region
          %543 = dma.done [#allocation11], 64
        $region80: #{tpu_custom_call.1} parent=63 // pred_fallthru
          _
        %s544 = sand.u32 %s26, 1
        %s545 = scalar_lea.sflag [#allocation5], %s544
        %s546 = sand.u32 %s118, 1
        %s547 = smul.addr %s546, 8
        %s548 = scalar_lea.vmem [#allocation12], %s547
        // Predicated region
        $region81: #{tpu_custom_call.1} parent=63 // pred_check
          %p549 = pneg %p131
        $region82: #{tpu_custom_call.1} parent=63 // pred_check_branch
          %551 = sbr.rel (%p549) target = $region84
        $region83: #{tpu_custom_call.1} parent=63 // pred_region
          %553 = dma.done %s545, 128
        $region84: #{tpu_custom_call.1} parent=63 // pred_fallthru
          _
        %s554 = sand.u32 %s26, 1
        %s555 = scalar_lea.sflag [#allocation5], %s554
        %s556 = sand.u32 %s144, 1
        %s557 = smul.addr %s556, 64
        %s558 = scalar_lea.vmem [#allocation13], %s557
        // Predicated region
        $region85: #{tpu_custom_call.1} parent=63 // pred_check
          %p559 = pneg %p157
        $region86: #{tpu_custom_call.1} parent=63 // pred_check_branch
          %561 = sbr.rel (%p559) target = $region88
        $region87: #{tpu_custom_call.1} parent=63 // pred_region
          %563 = dma.done %s555, 1024
        $region88: #{tpu_custom_call.1} parent=63 // pred_fallthru
          _
        %s564 = sand.u32 %s26, 1
        %s565 = scalar_lea.sflag [#allocation5], %s564
        %s566 = sand.u32 %s170, 1
        %s567 = smul.addr %s566, 128
        %s568 = scalar_lea.vmem [#allocation14], %s567
        // Predicated region
        $region89: #{tpu_custom_call.1} parent=63 // pred_check
          %p569 = pneg %p183
        $region90: #{tpu_custom_call.1} parent=63 // pred_check_branch
          %571 = sbr.rel (%p569) target = $region92
        $region91: #{tpu_custom_call.1} parent=63 // pred_region
          %573 = dma.done %s565, 2048
        $region92: #{tpu_custom_call.1} parent=63 // pred_fallthru
          _
        %s574 = sand.u32 %s26, 1
        %s575 = scalar_lea.sflag [#allocation5], %s574
        %s576 = sand.u32 %s196, 1
        %s577 = smul.addr %s576, 64
        %s578 = scalar_lea.vmem [#allocation15], %s577
        // Predicated region
        $region93: #{tpu_custom_call.1} parent=63 // pred_check
          %p579 = pneg %p209
        $region94: #{tpu_custom_call.1} parent=63 // pred_check_branch
          %581 = sbr.rel (%p579) target = $region96
        $region95: #{tpu_custom_call.1} parent=63 // pred_region
          %583 = dma.done %s575, 1024
        $region96: #{tpu_custom_call.1} parent=63 // pred_fallthru
          _
        %s584 = sand.u32 %s26, 1
        %s585 = scalar_lea.sflag [#allocation5], %s584
        %s586 = sand.u32 %s222, 1
        %s587 = smul.addr %s586, 256
        %s588 = scalar_lea.vmem [#allocation16], %s587
        // Predicated region
        $region97: #{tpu_custom_call.1} parent=63 // pred_check
          %p589 = pneg %p235
        $region98: #{tpu_custom_call.1} parent=63 // pred_check_branch
          %591 = sbr.rel (%p589) target = $region100
        $region99: #{tpu_custom_call.1} parent=63 // pred_region
          %593 = dma.done %s585, 4096
        $region100: #{tpu_custom_call.1} parent=63 // pred_fallthru
          _
        %s594 = sand.u32 %s26, 1
        %s595 = scalar_lea.sflag [#allocation5], %s594
        %s596 = sand.u32 %s274, 1
        %s597 = smul.addr %s596, 256
        %s598 = scalar_lea.vmem [#allocation17], %s597
        // Predicated region
        $region101: #{tpu_custom_call.1} parent=63 // pred_check
          %p599 = pneg %p287
        $region102: #{tpu_custom_call.1} parent=63 // pred_check_branch
          %601 = sbr.rel (%p599) target = $region104
        $region103: #{tpu_custom_call.1} parent=63 // pred_region
          %603 = dma.done %s595, 4096
        $region104: #{tpu_custom_call.1} parent=63 // pred_fallthru
          _
        %p604 = pneg %p42
        %p605 = pneg %p39
        %p606 = pneg %p63
        %p607 = pneg %p60
        %p608 = pneg %p84
        %p609 = pneg %p81
        %p610 = pneg %p105
        %p611 = pneg %p102
        %s612 = sand.u32 %s26, 1
        %s613 = scalar_lea.sflag [#allocation5], %s612
        %s614 = sand.u32 %s118, 1
        %s615 = smul.addr %s614, 8
        %s616 = scalar_lea.vmem [#allocation12], %s615
        %p617 = pneg %p131
        %p618 = pneg %p128
        %s619 = sand.u32 %s26, 1
        %s620 = scalar_lea.sflag [#allocation5], %s619
        %s621 = sand.u32 %s144, 1
        %s622 = smul.addr %s621, 64
        %s623 = scalar_lea.vmem [#allocation13], %s622
        %p624 = pneg %p157
        %p625 = pneg %p154
        %s626 = sand.u32 %s26, 1
        %s627 = scalar_lea.sflag [#allocation5], %s626
        %s628 = sand.u32 %s170, 1
        %s629 = smul.addr %s628, 128
        %s630 = scalar_lea.vmem [#allocation14], %s629
        %p631 = pneg %p183
        %p632 = pneg %p180
        %s633 = sand.u32 %s26, 1
        %s634 = scalar_lea.sflag [#allocation5], %s633
        %s635 = sand.u32 %s196, 1
        %s636 = smul.addr %s635, 64
        %s637 = scalar_lea.vmem [#allocation15], %s636
        %p638 = pneg %p209
        %p639 = pneg %p206
        %s640 = sand.u32 %s26, 1
        %s641 = scalar_lea.sflag [#allocation5], %s640
        %s642 = sand.u32 %s222, 1
        %s643 = smul.addr %s642, 256
        %s644 = scalar_lea.vmem [#allocation16], %s643
        %p645 = pneg %p235
        %p646 = pneg %p232
        %p647 = scmp.lt.s32.totalorder %s26, 1
        %s648 = scalar_select %p647, %s26, 1
        %s649 = smul.addr %s648, 4
        %s650 = scalar_lea.vmem %s9, %s649
        %p651 = pneg %p261
        %p652 = pneg %p258
        %s653 = sand.u32 %s26, 1
        %s654 = scalar_lea.sflag [#allocation5], %s653
        %s655 = sand.u32 %s274, 1
        %s656 = smul.addr %s655, 256
        %s657 = scalar_lea.vmem [#allocation17], %s656
        %p658 = pneg %p287
        %p659 = pneg %p284
        %p660 = pneg %p308
        %p661 = pneg %p305
        %p662 = scmp.lt.s32.totalorder %s26, 1
        %s663 = scalar_select %p662, %s26, 1
        %s664 = smul.addr %s663, 4
        %s665 = scalar_lea.vmem %s9, %s664
        %p667 = scmp.eq.s32.totalorder %s26, 0
        // Predicated region
        $region105: #{tpu_custom_call.1} parent=63 // pred_check
          %p668 = pneg %p667
        $region106: #{tpu_custom_call.1} parent=63 // pred_check_branch
          %670 = sbr.rel (%p668) target = $region108
        $region107: #{tpu_custom_call.1} parent=63 // pred_region
          %v671 = vld [vmem:[#allocation4] sm:$0xff]
          %v672 = vld [vmem:[#allocation4 + $0x8] sm:$0xff]
          %673 = vst [vmem:[#allocation2] sm:$0xff] %v671
          %674 = vst [vmem:[#allocation2 + $0x8] sm:$0xff] %v672
          %v675 = vld [vmem:[#allocation7] sm:$0xff]
          %v676 = vld [vmem:[#allocation7 + $0x8] sm:$0xff]
          %v677 = vld [vmem:[#allocation7 + $0x10] sm:$0xff]
          %v678 = vld [vmem:[#allocation7 + $0x18] sm:$0xff]
          %v679 = vld [vmem:[#allocation10] sm:$0x1]
          %v680 = vld [vmem:[#allocation10 + $0x1] sm:$0x1]
          %681 = vadd.xlane.f32.xlu0 %v675
          %v682 = vpop.xlane.xlu0 %681
          %683 = vadd.xlane.f32.xlu0 %v676
          %v684 = vpop.xlane.xlu0 %683
          %685 = vadd.xlane.f32.xlu0 %v677
          %v686 = vpop.xlane.xlu0 %685
          %687 = vadd.xlane.f32.xlu0 %v678
          %v688 = vpop.xlane.xlu0 %687
          %v689 = vrcp.pop 128.0
          %v690 = vmul.f32 128.0, %v689
          %v691 = vsub.f32 1.0, %v690
          %v692 = vmul.f32 %v689, %v691
          %v693 = vadd.f32 %v689, %v692
          %vm694 = vweird.f32 %v689
          %v695 = vsel %vm694, %v689, %v693
          %v696 = vmul.f32 %v682, %v695
          %v697 = vmul.f32 %v684, %v695
          %v698 = vmul.f32 %v686, %v695
          %v699 = vmul.f32 %v688, %v695
          %v700 = vsub.f32 %v675, %v696
          %v701 = vsub.f32 %v676, %v697
          %v702 = vsub.f32 %v677, %v698
          %v703 = vsub.f32 %v678, %v699
          %v704 = vmul.f32 %v700, %v700
          %v705 = vmul.f32 %v701, %v701
          %v706 = vmul.f32 %v702, %v702
          %v707 = vmul.f32 %v703, %v703
          %708 = vadd.xlane.f32.xlu0 %v704
          %v709 = vpop.xlane.xlu0 %708
          %710 = vadd.xlane.f32.xlu0 %v705
          %v711 = vpop.xlane.xlu0 %710
          %712 = vadd.xlane.f32.xlu0 %v706
          %v713 = vpop.xlane.xlu0 %712
          %714 = vadd.xlane.f32.xlu0 %v707
          %v715 = vpop.xlane.xlu0 %714
          %v716 = vmul.f32 %v709, %v695
          %v717 = vmul.f32 %v711, %v695
          %v718 = vmul.f32 %v713, %v695
          %v719 = vmul.f32 %v715, %v695
          %v720 = vadd.f32 %v716, 1e-05
          %v721 = vadd.f32 %v717, 1e-05
          %v722 = vadd.f32 %v718, 1e-05
          %v723 = vadd.f32 %v719, 1e-05
          %v724 = vrsqrt.pop %v720
          %v725 = vmul.f32 %v724, %v720
          %v726 = vmul.f32 %v725, %v724
          %v727 = vmul.f32 0.5, %v726
          %v728 = vsub.f32 1.5, %v727
          %v729 = vmul.f32 %v724, %v728
          %vm730 = vweird.f32 %v720
          %vm731 = vweird.f32 %v724
          %vm732 = vmor %vm730, %vm731
          %v733 = vsel %vm732, %v724, %v729
          %v734 = vrsqrt.pop %v721
          %v735 = vmul.f32 %v734, %v721
          %v736 = vmul.f32 %v735, %v734
          %v737 = vmul.f32 0.5, %v736
          %v738 = vsub.f32 1.5, %v737
          %v739 = vmul.f32 %v734, %v738
          %vm740 = vweird.f32 %v721
          %vm741 = vweird.f32 %v734
          %vm742 = vmor %vm740, %vm741
          %v743 = vsel %vm742, %v734, %v739
          %v744 = vrsqrt.pop %v722
          %v745 = vmul.f32 %v744, %v722
          %v746 = vmul.f32 %v745, %v744
          %v747 = vmul.f32 0.5, %v746
          %v748 = vsub.f32 1.5, %v747
          %v749 = vmul.f32 %v744, %v748
          %vm750 = vweird.f32 %v722
          %vm751 = vweird.f32 %v744
          %vm752 = vmor %vm750, %vm751
          %v753 = vsel %vm752, %v744, %v749
          %v754 = vrsqrt.pop %v723
          %v755 = vmul.f32 %v754, %v723
          %v756 = vmul.f32 %v755, %v754
          %v757 = vmul.f32 0.5, %v756
          %v758 = vsub.f32 1.5, %v757
          %v759 = vmul.f32 %v754, %v758
          %vm760 = vweird.f32 %v723
          %vm761 = vweird.f32 %v754
          %vm762 = vmor %vm760, %vm761
          %v763 = vsel %vm762, %v754, %v759
          %v764 = vmul.f32 %v700, %v733
          %v765 = vmul.f32 %v701, %v743
          %v766 = vmul.f32 %v702, %v753
          %v767 = vmul.f32 %v703, %v763
          %v768 = vperm.slane %v679, 0
          %v769 = vmul.f32 %v764, %v768
          %v770 = vmul.f32 %v765, %v768
          %v771 = vmul.f32 %v766, %v768
          %v772 = vmul.f32 %v767, %v768
          %v773 = vperm.slane %v680, 0
          %v774 = vadd.f32 %v769, %v773
          %v775 = vadd.f32 %v770, %v773
          %v776 = vadd.f32 %v771, %v773
          %v777 = vadd.f32 %v772, %v773
          %v778 = vpack.c.bf16 %v774, %v774
          %v779 = vpack.c.bf16 %v775, %v775
          %v780 = vpack.c.bf16 %v776, %v776
          %v781 = vpack.c.bf16 %v777, %v777
          %782 = vst [vmem:[#allocation3] sm:$0xf] %v778
          %783 = vst [vmem:[#allocation3 + $0x4] sm:$0xf] %v779
          %784 = vst [vmem:[#allocation3 + $0x8] sm:$0xf] %v780
          %785 = vst [vmem:[#allocation3 + $0xc] sm:$0xf] %v781
        $region108: #{tpu_custom_call.1} parent=63 // pred_fallthru
          _
        %v786 = vld [vmem:[#allocation2] sm:$0xff]
        %v787 = vld [vmem:[#allocation2 + $0x8] sm:$0xff]
        %v788 = vld [vmem:[#allocation3] sm:$0xf]
        %v789 = vld [vmem:[#allocation3 + $0x4] sm:$0xf]
        %v790 = vld [vmem:[#allocation3 + $0x8] sm:$0xf]
        %v791 = vld [vmem:[#allocation3 + $0xc] sm:$0xf]
        %v792 = vld [vmem:[#allocation9] sm:$0xff]
        %v793 = vld [vmem:[#allocation9 + $0x8] sm:$0xff]
        %v794 = vld [vmem:[%s548] sm:$0x1]
        %v795 = vld [vmem:[%s548 + $0x1] sm:$0x1]
        %v796 = vld [vmem:[%s548 + $0x2] sm:$0x1]
        %v797 = vld [vmem:[%s548 + $0x3] sm:$0x1]
        %v798 = vld [vmem:[%s548 + $0x4] sm:$0x1]
        %v799 = vld [vmem:[%s548 + $0x5] sm:$0x1]
        %800 = vadd.xlane.f32.xlu0 %v786
        %v801 = vpop.xlane.xlu0 %800
        %802 = vadd.xlane.f32.xlu0 %v787
        %v803 = vpop.xlane.xlu0 %802
        %v804 = vrcp.pop 128.0
        %v805 = vmul.f32 128.0, %v804
        %v806 = vsub.f32 1.0, %v805
        %v807 = vmul.f32 %v804, %v806
        %v808 = vadd.f32 %v804, %v807
        %vm809 = vweird.f32 %v804
        %v810 = vsel %vm809, %v804, %v808
        %v811 = vmul.f32 %v801, %v810
        %v812 = vmul.f32 %v803, %v810
        %v813 = vsub.f32 %v786, %v811
        %v814 = vsub.f32 %v787, %v812
        %v815 = vmul.f32 %v813, %v813
        %v816 = vmul.f32 %v814, %v814
        %817 = vadd.xlane.f32.xlu0 %v815
        %v818 = vpop.xlane.xlu0 %817
        %819 = vadd.xlane.f32.xlu0 %v816
        %v820 = vpop.xlane.xlu0 %819
        %v821 = vmul.f32 %v818, %v810
        %v822 = vmul.f32 %v820, %v810
        %v823 = vadd.f32 %v821, 1e-05
        %v824 = vadd.f32 %v822, 1e-05
        %v825 = vrsqrt.pop %v823
        %v826 = vmul.f32 %v825, %v823
        %v827 = vmul.f32 %v826, %v825
        %v828 = vmul.f32 0.5, %v827
        %v829 = vsub.f32 1.5, %v828
        %v830 = vmul.f32 %v825, %v829
        %vm831 = vweird.f32 %v823
        %vm832 = vweird.f32 %v825
        %vm833 = vmor %vm831, %vm832
        %v834 = vsel %vm833, %v825, %v830
        %v835 = vrsqrt.pop %v824
        %v836 = vmul.f32 %v835, %v824
        %v837 = vmul.f32 %v836, %v835
        %v838 = vmul.f32 0.5, %v837
        %v839 = vsub.f32 1.5, %v838
        %v840 = vmul.f32 %v835, %v839
        %vm841 = vweird.f32 %v824
        %vm842 = vweird.f32 %v835
        %vm843 = vmor %vm841, %vm842
        %v844 = vsel %vm843, %v835, %v840
        %v845 = vmul.f32 %v813, %v834
        %v846 = vmul.f32 %v814, %v844
        %v847 = vperm.slane %v794, 0
        %v848 = vmul.f32 %v845, %v847
        %v849 = vmul.f32 %v846, %v847
        %v850 = vperm.slane %v795, 0
        %v851 = vadd.f32 %v848, %v850
        %v852 = vadd.f32 %v849, %v850
        %v853 = vpack.c.bf16 %v852, %v851
        %v854 = vld [vmem:[%s558] sm:$0xf]
        %v855 = vld [vmem:[%s558 + $0x4] sm:$0xf]
        %v856 = vld [vmem:[%s558 + $0x8] sm:$0xf]
        %v857 = vld [vmem:[%s558 + $0xc] sm:$0xf]
        %v858 = vld [vmem:[%s558 + $0x10] sm:$0xf]
        %v859 = vld [vmem:[%s558 + $0x14] sm:$0xf]
        %v860 = vld [vmem:[%s558 + $0x18] sm:$0xf]
        %v861 = vld [vmem:[%s558 + $0x1c] sm:$0xf]
        %v862 = vld [vmem:[%s558 + $0x20] sm:$0xf]
        %v863 = vld [vmem:[%s558 + $0x24] sm:$0xf]
        %v864 = vld [vmem:[%s558 + $0x28] sm:$0xf]
        %v865 = vld [vmem:[%s558 + $0x2c] sm:$0xf]
        %v866 = vld [vmem:[%s558 + $0x30] sm:$0xf]
        %v867 = vld [vmem:[%s558 + $0x34] sm:$0xf]
        %v868 = vld [vmem:[%s558 + $0x38] sm:$0xf]
        %v869 = vld [vmem:[%s558 + $0x3c] sm:$0xf]
        %v886 = vunpack.c.l.b16 %v854
        %v887 = vunpack.c.l.b16 %v855
        %v888 = vunpack.c.l.b16 %v856
        %v889 = vunpack.c.l.b16 %v857
        %v890 = vunpack.c.l.b16 %v858
        %v891 = vunpack.c.l.b16 %v859
        %v892 = vunpack.c.l.b16 %v860
        %v893 = vunpack.c.l.b16 %v861
        %v894 = vunpack.c.l.b16 %v862
        %v895 = vunpack.c.l.b16 %v863
        %v896 = vunpack.c.l.b16 %v864
        %v897 = vunpack.c.l.b16 %v865
        %v898 = vunpack.c.l.b16 %v866
        %v899 = vunpack.c.l.b16 %v867
        %v900 = vunpack.c.l.b16 %v868
        %v901 = vunpack.c.l.b16 %v869
        %v902 = vpack.c.b16 %v887, %v886
        %v903 = vpack.c.b16 %v889, %v888
        %v904 = vpack.c.b16 %v891, %v890
        %v905 = vpack.c.b16 %v893, %v892
        %v906 = vpack.c.b16 %v895, %v894
        %v907 = vpack.c.b16 %v897, %v896
        %v908 = vpack.c.b16 %v899, %v898
        %v909 = vpack.c.b16 %v901, %v900
        %918 = vmatpush.bf16.msra.mxu0 %v909
        %919 = vmatpush.bf16.msra.mxu0 %v908
        %920 = vmatpush.bf16.msra.mxu0 %v907
        %921 = vmatpush.bf16.msra.mxu0 %v906
        %922 = vmatpush.bf16.msra.mxu0 %v905
        %923 = vmatpush.bf16.msra.mxu0 %v904
        %924 = vmatpush.bf16.msra.mxu0 %v903
        %925 = vmatpush.bf16.msra.mxu0 %v902
        %926 = vmatmul.bf16.gmra.mxu0 %v853
        %v927 = vpop.f32.mrf.mxu0
        %v928 = vadd.f32 0.0, %v927
        %v929 = vpop.f32.mrf.mxu0
        %v930 = vadd.f32 0.0, %v929
        %931 = vdwg.mxu0
        %v932 = vpack.c.bf16 %v928, %v928
        %v933 = vpack.c.bf16 %v930, %v930
        %v934 = vld [vmem:[%s568] sm:$0xff]
        %v935 = vld [vmem:[%s568 + $0x8] sm:$0xff]
        %v936 = vld [vmem:[%s568 + $0x10] sm:$0xff]
        %v937 = vld [vmem:[%s568 + $0x18] sm:$0xff]
        %v938 = vld [vmem:[%s568 + $0x20] sm:$0xff]
        %v939 = vld [vmem:[%s568 + $0x28] sm:$0xff]
        %v940 = vld [vmem:[%s568 + $0x30] sm:$0xff]
        %v941 = vld [vmem:[%s568 + $0x38] sm:$0xff]
        %v942 = vld [vmem:[%s568 + $0x40] sm:$0xff]
        %v943 = vld [vmem:[%s568 + $0x48] sm:$0xff]
        %v944 = vld [vmem:[%s568 + $0x50] sm:$0xff]
        %v945 = vld [vmem:[%s568 + $0x58] sm:$0xff]
        %v946 = vld [vmem:[%s568 + $0x60] sm:$0xff]
        %v947 = vld [vmem:[%s568 + $0x68] sm:$0xff]
        %v948 = vld [vmem:[%s568 + $0x70] sm:$0xff]
        %v949 = vld [vmem:[%s568 + $0x78] sm:$0xff]
        %v954 = vunpack.c.l.b16 %v788
        %v955 = vunpack.c.l.b16 %v789
        %v956 = vunpack.c.l.b16 %v790
        %v957 = vunpack.c.l.b16 %v791
        %v958 = vpack.c.b16 %v955, %v954
        %v959 = vpack.c.b16 %v957, %v956
        %v978 = vunpack.c.l.b16 %v934
        %v979 = vunpack.c.h.b16 %v934
        %v980 = vunpack.c.l.b16 %v935
        %v981 = vunpack.c.h.b16 %v935
        %v982 = vunpack.c.l.b16 %v936
        %v983 = vunpack.c.h.b16 %v936
        %v984 = vunpack.c.l.b16 %v937
        %v985 = vunpack.c.h.b16 %v937
        %v986 = vunpack.c.l.b16 %v938
        %v987 = vunpack.c.h.b16 %v938
        %v988 = vunpack.c.l.b16 %v939
        %v989 = vunpack.c.h.b16 %v939
        %v990 = vunpack.c.l.b16 %v940
        %v991 = vunpack.c.h.b16 %v940
        %v992 = vunpack.c.l.b16 %v941
        %v993 = vunpack.c.h.b16 %v941
        %v994 = vunpack.c.l.b16 %v942
        %v995 = vunpack.c.h.b16 %v942
        %v996 = vunpack.c.l.b16 %v943
        %v997 = vunpack.c.h.b16 %v943
        %v998 = vunpack.c.l.b16 %v944
        %v999 = vunpack.c.h.b16 %v944
        %v1000 = vunpack.c.l.b16 %v945
        %v1001 = vunpack.c.h.b16 %v945
        %v1002 = vunpack.c.l.b16 %v946
        %v1003 = vunpack.c.h.b16 %v946
        %v1004 = vunpack.c.l.b16 %v947
        %v1005 = vunpack.c.h.b16 %v947
        %v1006 = vunpack.c.l.b16 %v948
        %v1007 = vunpack.c.h.b16 %v948
        %v1008 = vunpack.c.l.b16 %v949
        %v1009 = vunpack.c.h.b16 %v949
        %v1010 = vpack.c.b16 %v980, %v978
        %v1011 = vpack.c.b16 %v981, %v979
        %v1012 = vpack.c.b16 %v984, %v982
        %v1013 = vpack.c.b16 %v985, %v983
        %v1014 = vpack.c.b16 %v988, %v986
        %v1015 = vpack.c.b16 %v989, %v987
        %v1016 = vpack.c.b16 %v992, %v990
        %v1017 = vpack.c.b16 %v993, %v991
        %v1018 = vpack.c.b16 %v996, %v994
        %v1019 = vpack.c.b16 %v997, %v995
        %v1020 = vpack.c.b16 %v1000, %v998
        %v1021 = vpack.c.b16 %v1001, %v999
        %v1022 = vpack.c.b16 %v1004, %v1002
        %v1023 = vpack.c.b16 %v1005, %v1003
        %v1024 = vpack.c.b16 %v1008, %v1006
        %v1025 = vpack.c.b16 %v1009, %v1007
        %1042 = vmatpush.bf16.msra.mxu0 %v1024
        %1043 = vmatpush.bf16.msra.mxu0 %v1022
        %1044 = vmatpush.bf16.msra.mxu0 %v1020
        %1045 = vmatpush.bf16.msra.mxu0 %v1018
        %1046 = vmatpush.bf16.msra.mxu0 %v1016
        %1047 = vmatpush.bf16.msra.mxu0 %v1014
        %1048 = vmatpush.bf16.msra.mxu0 %v1012
        %1049 = vmatpush.bf16.msra.mxu0 %v1010
        %1050 = vmatmul.bf16.gmra.mxu0 %v958
        %v1051 = vpop.f32.mrf.mxu0
        %v1052 = vadd.f32 0.0, %v1051
        %v1053 = vpop.f32.mrf.mxu0
        %v1054 = vadd.f32 0.0, %v1053
        %1055 = vmatmul.bf16.gmra.mxu0 %v959
        %v1056 = vpop.f32.mrf.mxu0
        %v1057 = vadd.f32 0.0, %v1056
        %v1058 = vpop.f32.mrf.mxu0
        %v1059 = vadd.f32 0.0, %v1058
        %1060 = vdwg.mxu0
        %1061 = vmatpush.bf16.msra.mxu0 %v1025
        %1062 = vmatpush.bf16.msra.mxu0 %v1023
        %1063 = vmatpush.bf16.msra.mxu0 %v1021
        %1064 = vmatpush.bf16.msra.mxu0 %v1019
        %1065 = vmatpush.bf16.msra.mxu0 %v1017
        %1066 = vmatpush.bf16.msra.mxu0 %v1015
        %1067 = vmatpush.bf16.msra.mxu0 %v1013
        %1068 = vmatpush.bf16.msra.mxu0 %v1011
        %1069 = vmatmul.bf16.gmra.mxu0 %v958
        %v1070 = vpop.f32.mrf.mxu0
        %v1071 = vadd.f32 0.0, %v1070
        %v1072 = vpop.f32.mrf.mxu0
        %v1073 = vadd.f32 0.0, %v1072
        %1074 = vmatmul.bf16.gmra.mxu0 %v959
        %v1075 = vpop.f32.mrf.mxu0
        %v1076 = vadd.f32 0.0, %v1075
        %v1077 = vpop.f32.mrf.mxu0
        %v1078 = vadd.f32 0.0, %v1077
        %1079 = vdwg.mxu0
        %v1080 = vpack.c.bf16 %v1052, %v1052
        %v1081 = vpack.c.bf16 %v1054, %v1054
        %v1082 = vpack.c.bf16 %v1057, %v1057
        %v1083 = vpack.c.bf16 %v1059, %v1059
        %v1084 = vpack.c.bf16 %v1071, %v1071
        %v1085 = vpack.c.bf16 %v1073, %v1073
        %v1086 = vpack.c.bf16 %v1076, %v1076
        %v1087 = vpack.c.bf16 %v1078, %v1078
        %v1090 = vunpack.c.l.b16 %v932
        %v1091 = vunpack.c.l.b16 %v933
        %v1092 = vpack.c.b16 %v1091, %v1090
        %v1097 = vunpack.c.l.b16 %v1080
        %v1098 = vunpack.c.l.b16 %v1081
        %v1099 = vunpack.c.l.b16 %v1082
        %v1100 = vunpack.c.l.b16 %v1083
        %v1101 = vpack.c.b16 %v1098, %v1097
        %v1102 = vpack.c.b16 %v1100, %v1099
        %vm1103 = vcmask 523264
        %v1105 = vsel %vm1103, %v1092, 0
        %v1108 = vsel %vm1103, %v1101, 0
        %v1111 = vsel %vm1103, %v1102, 0
        %1113 = vmatpush.bf16.xpose.msra.mxu0 0
        %1114 = vmatpush.bf16.xpose.msra.mxu0 0
        %1115 = vmatpush.bf16.xpose.msra.mxu0 0
        %1116 = vmatpush.bf16.xpose.msra.mxu0 0
        %1117 = vmatpush.bf16.xpose.msra.mxu0 0
        %1118 = vmatpush.bf16.xpose.msra.mxu0 0
        %1119 = vmatpush.bf16.xpose.msra.mxu0 %v1111
        %1120 = vmatpush.bf16.xpose.msra.mxu0 %v1108
        %1121 = vmatmul.bf16.gmra.mxu0 %v1105
        %v1122 = vpop.f32.mrf.mxu0
        %v1123 = vadd.f32 0.0, %v1122
        %v1124 = vpop.f32.mrf.mxu0
        %v1125 = vadd.f32 0.0, %v1124
        %1126 = vdwg.mxu0
        %v1127 = vmul.f32 %v1123, 0.125
        %v1128 = vmul.f32 %v1125, 0.125
        %v1129 = vadd.f32 %v1127, %v792
        %v1130 = vadd.f32 %v1128, %v793
        %vm1131 = vcmask 261120
        %v1132 = vsel %vm1131, %v1129, -inf
        %1133 = vmax.xlane.f32.xlu0 %v1132
        %v1134 = vpop.xlane.xlu0 %1133
        %v1135 = vsel %vm1131, %v1130, -inf
        %1136 = vmax.xlane.f32.xlu0 %v1135
        %v1137 = vpop.xlane.xlu0 %1136
        %v1138 = vsub.f32 %v1129, %v1134
        %v1139 = vsub.f32 %v1130, %v1137
        %v1140 = vmul.f32 %v1138, 1.442695
        %v1141 = vpow.pop %v1140
        %v1142 = vmul.f32 %v1139, 1.442695
        %v1143 = vpow.pop %v1142
        %v1144 = vsel %vm1131, %v1141, 0.0
        %1145 = vadd.xlane.f32.xlu0 %v1144
        %v1146 = vpop.xlane.xlu0 %1145
        %v1147 = vsel %vm1131, %v1143, 0.0
        %1148 = vadd.xlane.f32.xlu0 %v1147
        %v1149 = vpop.xlane.xlu0 %1148
        %v1150 = vrcp.pop %v1146
        %v1151 = vrcp.pop %v1149
        %v1152 = vmul.f32 %v1141, %v1150
        %v1153 = vmul.f32 %v1143, %v1151
        %v1154 = vpack.c.bf16 %v1153, %v1152
        %v1159 = vunpack.c.l.b16 %v1084
        %v1160 = vunpack.c.l.b16 %v1085
        %v1161 = vunpack.c.l.b16 %v1086
        %v1162 = vunpack.c.l.b16 %v1087
        %v1163 = vpack.c.b16 %v1160, %v1159
        %v1164 = vpack.c.b16 %v1162, %v1161
        %v1168 = vsel %vm1131, %v1154, 0
        %1170 = vmatpush.bf16.msra.mxu0 0
        %1171 = vmatpush.bf16.msra.mxu0 0
        %1172 = vmatpush.bf16.msra.mxu0 0
        %1173 = vmatpush.bf16.msra.mxu0 0
        %1174 = vmatpush.bf16.msra.mxu0 0
        %1175 = vmatpush.bf16.msra.mxu0 0
        %1176 = vmatpush.bf16.msra.mxu0 %v1164
        %1177 = vmatpush.bf16.msra.mxu0 %v1163
        %1178 = vmatmul.bf16.gmra.mxu0 %v1168
        %v1179 = vpop.f32.mrf.mxu0
        %v1180 = vadd.f32 0.0, %v1179
        %v1181 = vpop.f32.mrf.mxu0
        %v1182 = vadd.f32 0.0, %v1181
        %1183 = vdwg.mxu0
        %v1184 = vpack.c.bf16 %v1182, %v1180
        %v1185 = vld [vmem:[%s578] sm:$0xf]
        %v1186 = vld [vmem:[%s578 + $0x4] sm:$0xf]
        %v1187 = vld [vmem:[%s578 + $0x8] sm:$0xf]
        %v1188 = vld [vmem:[%s578 + $0xc] sm:$0xf]
        %v1189 = vld [vmem:[%s578 + $0x10] sm:$0xf]
        %v1190 = vld [vmem:[%s578 + $0x14] sm:$0xf]
        %v1191 = vld [vmem:[%s578 + $0x18] sm:$0xf]
        %v1192 = vld [vmem:[%s578 + $0x1c] sm:$0xf]
        %1193 = vrot.lane.b32.xlu0 %v1092, 64
        %v1194 = vpop.permute.xlu0 %1193
        %1195 = vrot.lane.b32.xlu0 %v1101, 64
        %v1196 = vpop.permute.xlu0 %1195
        %1197 = vrot.lane.b32.xlu0 %v1102, 64
        %v1198 = vpop.permute.xlu0 %1197
        %v1200 = vsel %vm1103, %v1194, 0
        %v1203 = vsel %vm1103, %v1196, 0
        %v1206 = vsel %vm1103, %v1198, 0
        %1208 = vmatpush.bf16.xpose.msra.mxu0 0
        %1209 = vmatpush.bf16.xpose.msra.mxu0 0
        %1210 = vmatpush.bf16.xpose.msra.mxu0 0
        %1211 = vmatpush.bf16.xpose.msra.mxu0 0
        %1212 = vmatpush.bf16.xpose.msra.mxu0 0
        %1213 = vmatpush.bf16.xpose.msra.mxu0 0
        %1214 = vmatpush.bf16.xpose.msra.mxu0 %v1206
        %1215 = vmatpush.bf16.xpose.msra.mxu0 %v1203
        %1216 = vmatmul.bf16.gmra.mxu0 %v1200
        %v1217 = vpop.f32.mrf.mxu0
        %v1218 = vadd.f32 0.0, %v1217
        %v1219 = vpop.f32.mrf.mxu0
        %v1220 = vadd.f32 0.0, %v1219
        %1221 = vdwg.mxu0
        %v1222 = vmul.f32 %v1218, 0.125
        %v1223 = vmul.f32 %v1220, 0.125
        %v1224 = vadd.f32 %v1222, %v792
        %v1225 = vadd.f32 %v1223, %v793
        %v1226 = vsel %vm1131, %v1224, -inf
        %1227 = vmax.xlane.f32.xlu0 %v1226
        %v1228 = vpop.xlane.xlu0 %1227
        %v1229 = vsel %vm1131, %v1225, -inf
        %1230 = vmax.xlane.f32.xlu0 %v1229
        %v1231 = vpop.xlane.xlu0 %1230
        %v1232 = vsub.f32 %v1224, %v1228
        %v1233 = vsub.f32 %v1225, %v1231
        %v1234 = vmul.f32 %v1232, 1.442695
        %v1235 = vpow.pop %v1234
        %v1236 = vmul.f32 %v1233, 1.442695
        %v1237 = vpow.pop %v1236
        %v1238 = vsel %vm1131, %v1235, 0.0
        %1239 = vadd.xlane.f32.xlu0 %v1238
        %v1240 = vpop.xlane.xlu0 %1239
        %v1241 = vsel %vm1131, %v1237, 0.0
        %1242 = vadd.xlane.f32.xlu0 %v1241
        %v1243 = vpop.xlane.xlu0 %1242
        %v1244 = vrcp.pop %v1240
        %v1245 = vrcp.pop %v1243
        %v1246 = vmul.f32 %v1235, %v1244
        %v1247 = vmul.f32 %v1237, %v1245
        %v1248 = vpack.c.bf16 %v1247, %v1246
        %1249 = vrot.lane.b32.xlu0 %v1163, 64
        %v1250 = vpop.permute.xlu0 %1249
        %1251 = vrot.lane.b32.xlu0 %v1164, 64
        %v1252 = vpop.permute.xlu0 %1251
        %v1256 = vsel %vm1131, %v1248, 0
        %1258 = vmatpush.bf16.msra.mxu0 0
        %1259 = vmatpush.bf16.msra.mxu0 0
        %1260 = vmatpush.bf16.msra.mxu0 0
        %1261 = vmatpush.bf16.msra.mxu0 0
        %1262 = vmatpush.bf16.msra.mxu0 0
        %1263 = vmatpush.bf16.msra.mxu0 0
        %1264 = vmatpush.bf16.msra.mxu0 %v1252
        %1265 = vmatpush.bf16.msra.mxu0 %v1250
        %1266 = vmatmul.bf16.gmra.mxu0 %v1256
        %v1267 = vpop.f32.mrf.mxu0
        %v1268 = vadd.f32 0.0, %v1267
        %v1269 = vpop.f32.mrf.mxu0
        %v1270 = vadd.f32 0.0, %v1269
        %1271 = vdwg.mxu0
        %v1272 = vpack.c.bf16 %v1270, %v1268
        %v1273 = vld [vmem:[%s578 + $0x20] sm:$0xf]
        %v1274 = vld [vmem:[%s578 + $0x24] sm:$0xf]
        %v1275 = vld [vmem:[%s578 + $0x28] sm:$0xf]
        %v1276 = vld [vmem:[%s578 + $0x2c] sm:$0xf]
        %v1277 = vld [vmem:[%s578 + $0x30] sm:$0xf]
        %v1278 = vld [vmem:[%s578 + $0x34] sm:$0xf]
        %v1279 = vld [vmem:[%s578 + $0x38] sm:$0xf]
        %v1280 = vld [vmem:[%s578 + $0x3c] sm:$0xf]
        %v1289 = vunpack.c.l.b16 %v1273
        %v1290 = vunpack.c.l.b16 %v1274
        %v1291 = vunpack.c.l.b16 %v1275
        %v1292 = vunpack.c.l.b16 %v1276
        %v1293 = vunpack.c.l.b16 %v1277
        %v1294 = vunpack.c.l.b16 %v1278
        %v1295 = vunpack.c.l.b16 %v1279
        %v1296 = vunpack.c.l.b16 %v1280
        %v1297 = vpack.c.b16 %v1290, %v1289
        %v1298 = vpack.c.b16 %v1292, %v1291
        %v1299 = vpack.c.b16 %v1294, %v1293
        %v1300 = vpack.c.b16 %v1296, %v1295
        %v1306 = vsel %vm1103, %v1272, 0
        %1308 = vmatpush.bf16.msra.mxu0 0
        %1309 = vmatpush.bf16.msra.mxu0 0
        %1310 = vmatpush.bf16.msra.mxu0 0
        %1311 = vmatpush.bf16.msra.mxu0 0
        %1312 = vmatpush.bf16.msra.mxu0 %v1300
        %1313 = vmatpush.bf16.msra.mxu0 %v1299
        %1314 = vmatpush.bf16.msra.mxu0 %v1298
        %1315 = vmatpush.bf16.msra.mxu0 %v1297
        %1316 = vmatmul.bf16.gmra.mxu0 %v1306
        %v1317 = vpop.f32.mrf.mxu0
        %v1318 = vadd.f32 0.0, %v1317
        %v1319 = vpop.f32.mrf.mxu0
        %v1320 = vadd.f32 0.0, %v1319
        %1321 = vdwg.mxu0
        %v1330 = vunpack.c.l.b16 %v1185
        %v1331 = vunpack.c.l.b16 %v1186
        %v1332 = vunpack.c.l.b16 %v1187
        %v1333 = vunpack.c.l.b16 %v1188
        %v1334 = vunpack.c.l.b16 %v1189
        %v1335 = vunpack.c.l.b16 %v1190
        %v1336 = vunpack.c.l.b16 %v1191
        %v1337 = vunpack.c.l.b16 %v1192
        %v1338 = vpack.c.b16 %v1331, %v1330
        %v1339 = vpack.c.b16 %v1333, %v1332
        %v1340 = vpack.c.b16 %v1335, %v1334
        %v1341 = vpack.c.b16 %v1337, %v1336
        %v1347 = vsel %vm1103, %v1184, 0
        %1349 = vmatpush.bf16.msra.mxu0 0
        %1350 = vmatpush.bf16.msra.mxu0 0
        %1351 = vmatpush.bf16.msra.mxu0 0
        %1352 = vmatpush.bf16.msra.mxu0 0
        %1353 = vmatpush.bf16.msra.mxu0 %v1341
        %1354 = vmatpush.bf16.msra.mxu0 %v1340
        %1355 = vmatpush.bf16.msra.mxu0 %v1339
        %1356 = vmatpush.bf16.msra.mxu0 %v1338
        %1357 = vmatmul.bf16.gmra.mxu0 %v1347
        %v1358 = vpop.f32.mrf.mxu0
        %v1359 = vadd.f32 %v1318, %v1358
        %v1360 = vpop.f32.mrf.mxu0
        %v1361 = vadd.f32 %v1320, %v1360
        %1362 = vdwg.mxu0
        %v1363 = vadd.f32 %v786, %v1359
        %v1364 = vadd.f32 %v787, %v1361
        %v1365 = vperm.slane %v796, 0
        %v1366 = vadd.f32 %v1363, %v1365
        %v1367 = vadd.f32 %v1364, %v1365
        %1368 = vadd.xlane.f32.xlu0 %v1366
        %v1369 = vpop.xlane.xlu0 %1368
        %1370 = vadd.xlane.f32.xlu0 %v1367
        %v1371 = vpop.xlane.xlu0 %1370
        %v1372 = vmul.f32 %v1369, %v810
        %v1373 = vmul.f32 %v1371, %v810
        %v1374 = vsub.f32 %v1366, %v1372
        %v1375 = vsub.f32 %v1367, %v1373
        %v1376 = vmul.f32 %v1374, %v1374
        %v1377 = vmul.f32 %v1375, %v1375
        %1378 = vadd.xlane.f32.xlu0 %v1376
        %v1379 = vpop.xlane.xlu0 %1378
        %1380 = vadd.xlane.f32.xlu0 %v1377
        %v1381 = vpop.xlane.xlu0 %1380
        %v1382 = vmul.f32 %v1379, %v810
        %v1383 = vmul.f32 %v1381, %v810
        %v1384 = vadd.f32 %v1382, 1e-05
        %v1385 = vadd.f32 %v1383, 1e-05
        %v1386 = vrsqrt.pop %v1384
        %v1387 = vmul.f32 %v1386, %v1384
        %v1388 = vmul.f32 %v1387, %v1386
        %v1389 = vmul.f32 0.5, %v1388
        %v1390 = vsub.f32 1.5, %v1389
        %v1391 = vmul.f32 %v1386, %v1390
        %vm1392 = vweird.f32 %v1384
        %vm1393 = vweird.f32 %v1386
        %vm1394 = vmor %vm1392, %vm1393
        %v1395 = vsel %vm1394, %v1386, %v1391
        %v1396 = vrsqrt.pop %v1385
        %v1397 = vmul.f32 %v1396, %v1385
        %v1398 = vmul.f32 %v1397, %v1396
        %v1399 = vmul.f32 0.5, %v1398
        %v1400 = vsub.f32 1.5, %v1399
        %v1401 = vmul.f32 %v1396, %v1400
        %vm1402 = vweird.f32 %v1385
        %vm1403 = vweird.f32 %v1396
        %vm1404 = vmor %vm1402, %vm1403
        %v1405 = vsel %vm1404, %v1396, %v1401
        %v1406 = vmul.f32 %v1374, %v1395
        %v1407 = vmul.f32 %v1375, %v1405
        %v1408 = vperm.slane %v797, 0
        %v1409 = vmul.f32 %v1406, %v1408
        %v1410 = vmul.f32 %v1407, %v1408
        %v1411 = vperm.slane %v798, 0
        %v1412 = vadd.f32 %v1409, %v1411
        %v1413 = vadd.f32 %v1410, %v1411
        %v1414 = vpack.c.bf16 %v1413, %v1412
        %v1415 = vld [vmem:[%s588] sm:$0xff]
        %v1416 = vld [vmem:[%s588 + $0x8] sm:$0xff]
        %v1417 = vld [vmem:[%s588 + $0x10] sm:$0xff]
        %v1418 = vld [vmem:[%s588 + $0x18] sm:$0xff]
        %v1419 = vld [vmem:[%s588 + $0x20] sm:$0xff]
        %v1420 = vld [vmem:[%s588 + $0x28] sm:$0xff]
        %v1421 = vld [vmem:[%s588 + $0x30] sm:$0xff]
        %v1422 = vld [vmem:[%s588 + $0x38] sm:$0xff]
        %v1423 = vld [vmem:[%s588 + $0x40] sm:$0xff]
        %v1424 = vld [vmem:[%s588 + $0x48] sm:$0xff]
        %v1425 = vld [vmem:[%s588 + $0x50] sm:$0xff]
        %v1426 = vld [vmem:[%s588 + $0x58] sm:$0xff]
        %v1427 = vld [vmem:[%s588 + $0x60] sm:$0xff]
        %v1428 = vld [vmem:[%s588 + $0x68] sm:$0xff]
        %v1429 = vld [vmem:[%s588 + $0x70] sm:$0xff]
        %v1430 = vld [vmem:[%s588 + $0x78] sm:$0xff]
        %v1431 = vld [vmem:[%s588 + $0x80] sm:$0xff]
        %v1432 = vld [vmem:[%s588 + $0x88] sm:$0xff]
        %v1433 = vld [vmem:[%s588 + $0x90] sm:$0xff]
        %v1434 = vld [vmem:[%s588 + $0x98] sm:$0xff]
        %v1435 = vld [vmem:[%s588 + $0xa0] sm:$0xff]
        %v1436 = vld [vmem:[%s588 + $0xa8] sm:$0xff]
        %v1437 = vld [vmem:[%s588 + $0xb0] sm:$0xff]
        %v1438 = vld [vmem:[%s588 + $0xb8] sm:$0xff]
        %v1439 = vld [vmem:[%s588 + $0xc0] sm:$0xff]
        %v1440 = vld [vmem:[%s588 + $0xc8] sm:$0xff]
        %v1441 = vld [vmem:[%s588 + $0xd0] sm:$0xff]
        %v1442 = vld [vmem:[%s588 + $0xd8] sm:$0xff]
        %v1443 = vld [vmem:[%s588 + $0xe0] sm:$0xff]
        %v1444 = vld [vmem:[%s588 + $0xe8] sm:$0xff]
        %v1445 = vld [vmem:[%s588 + $0xf0] sm:$0xff]
        %v1446 = vld [vmem:[%s588 + $0xf8] sm:$0xff]
        %v1447 = vld [vmem:[%s665] sm:$0xf]
        %v1449 = vperm.slane %v1447, 0
        %v1450 = vperm.slane %v1447, 1
        %v1451 = vperm.slane %v1447, 2
        %v1452 = vperm.slane %v1447, 3
        %v1489 = vunpack.c.l.b16 %v1415
        %v1490 = vunpack.c.h.b16 %v1415
        %v1491 = vunpack.c.l.b16 %v1416
        %v1492 = vunpack.c.h.b16 %v1416
        %v1493 = vunpack.c.l.b16 %v1417
        %v1494 = vunpack.c.h.b16 %v1417
        %v1495 = vunpack.c.l.b16 %v1418
        %v1496 = vunpack.c.h.b16 %v1418
        %v1497 = vunpack.c.l.b16 %v1419
        %v1498 = vunpack.c.h.b16 %v1419
        %v1499 = vunpack.c.l.b16 %v1420
        %v1500 = vunpack.c.h.b16 %v1420
        %v1501 = vunpack.c.l.b16 %v1421
        %v1502 = vunpack.c.h.b16 %v1421
        %v1503 = vunpack.c.l.b16 %v1422
        %v1504 = vunpack.c.h.b16 %v1422
        %v1505 = vunpack.c.l.b16 %v1423
        %v1506 = vunpack.c.h.b16 %v1423
        %v1507 = vunpack.c.l.b16 %v1424
        %v1508 = vunpack.c.h.b16 %v1424
        %v1509 = vunpack.c.l.b16 %v1425
        %v1510 = vunpack.c.h.b16 %v1425
        %v1511 = vunpack.c.l.b16 %v1426
        %v1512 = vunpack.c.h.b16 %v1426
        %v1513 = vunpack.c.l.b16 %v1427
        %v1514 = vunpack.c.h.b16 %v1427
        %v1515 = vunpack.c.l.b16 %v1428
        %v1516 = vunpack.c.h.b16 %v1428
        %v1517 = vunpack.c.l.b16 %v1429
        %v1518 = vunpack.c.h.b16 %v1429
        %v1519 = vunpack.c.l.b16 %v1430
        %v1520 = vunpack.c.h.b16 %v1430
        %v1521 = vunpack.c.l.b16 %v1431
        %v1522 = vunpack.c.h.b16 %v1431
        %v1523 = vunpack.c.l.b16 %v1432
        %v1524 = vunpack.c.h.b16 %v1432
        %v1525 = vunpack.c.l.b16 %v1433
        %v1526 = vunpack.c.h.b16 %v1433
        %v1527 = vunpack.c.l.b16 %v1434
        %v1528 = vunpack.c.h.b16 %v1434
        %v1529 = vunpack.c.l.b16 %v1435
        %v1530 = vunpack.c.h.b16 %v1435
        %v1531 = vunpack.c.l.b16 %v1436
        %v1532 = vunpack.c.h.b16 %v1436
        %v1533 = vunpack.c.l.b16 %v1437
        %v1534 = vunpack.c.h.b16 %v1437
        %v1535 = vunpack.c.l.b16 %v1438
        %v1536 = vunpack.c.h.b16 %v1438
        %v1537 = vunpack.c.l.b16 %v1439
        %v1538 = vunpack.c.h.b16 %v1439
        %v1539 = vunpack.c.l.b16 %v1440
        %v1540 = vunpack.c.h.b16 %v1440
        %v1541 = vunpack.c.l.b16 %v1441
        %v1542 = vunpack.c.h.b16 %v1441
        %v1543 = vunpack.c.l.b16 %v1442
        %v1544 = vunpack.c.h.b16 %v1442
        %v1545 = vunpack.c.l.b16 %v1443
        %v1546 = vunpack.c.h.b16 %v1443
        %v1547 = vunpack.c.l.b16 %v1444
        %v1548 = vunpack.c.h.b16 %v1444
        %v1549 = vunpack.c.l.b16 %v1445
        %v1550 = vunpack.c.h.b16 %v1445
        %v1551 = vunpack.c.l.b16 %v1446
        %v1552 = vunpack.c.h.b16 %v1446
        %v1553 = vpack.c.b16 %v1493, %v1489
        %v1554 = vpack.c.b16 %v1494, %v1490
        %v1555 = vpack.c.b16 %v1495, %v1491
        %v1556 = vpack.c.b16 %v1496, %v1492
        %v1557 = vpack.c.b16 %v1501, %v1497
        %v1558 = vpack.c.b16 %v1502, %v1498
        %v1559 = vpack.c.b16 %v1503, %v1499
        %v1560 = vpack.c.b16 %v1504, %v1500
        %v1561 = vpack.c.b16 %v1509, %v1505
        %v1562 = vpack.c.b16 %v1510, %v1506
        %v1563 = vpack.c.b16 %v1511, %v1507
        %v1564 = vpack.c.b16 %v1512, %v1508
        %v1565 = vpack.c.b16 %v1517, %v1513
        %v1566 = vpack.c.b16 %v1518, %v1514
        %v1567 = vpack.c.b16 %v1519, %v1515
        %v1568 = vpack.c.b16 %v1520, %v1516
        %v1569 = vpack.c.b16 %v1525, %v1521
        %v1570 = vpack.c.b16 %v1526, %v1522
        %v1571 = vpack.c.b16 %v1527, %v1523
        %v1572 = vpack.c.b16 %v1528, %v1524
        %v1573 = vpack.c.b16 %v1533, %v1529
        %v1574 = vpack.c.b16 %v1534, %v1530
        %v1575 = vpack.c.b16 %v1535, %v1531
        %v1576 = vpack.c.b16 %v1536, %v1532
        %v1577 = vpack.c.b16 %v1541, %v1537
        %v1578 = vpack.c.b16 %v1542, %v1538
        %v1579 = vpack.c.b16 %v1543, %v1539
        %v1580 = vpack.c.b16 %v1544, %v1540
        %v1581 = vpack.c.b16 %v1549, %v1545
        %v1582 = vpack.c.b16 %v1550, %v1546
        %v1583 = vpack.c.b16 %v1551, %v1547
        %v1584 = vpack.c.b16 %v1552, %v1548
        %1617 = vmatpush.bf16.msra.mxu0 %v1581
        %1618 = vmatpush.bf16.msra.mxu0 %v1577
        %1619 = vmatpush.bf16.msra.mxu0 %v1573
        %1620 = vmatpush.bf16.msra.mxu0 %v1569
        %1621 = vmatpush.bf16.msra.mxu0 %v1565
        %1622 = vmatpush.bf16.msra.mxu0 %v1561
        %1623 = vmatpush.bf16.msra.mxu0 %v1557
        %1624 = vmatpush.bf16.msra.mxu0 %v1553
        %1625 = vmatmul.bf16.gmra.mxu0 %v1414
        %v1626 = vpop.f32.mrf.mxu0
        %v1627 = vadd.f32 %v1449, %v1626
        %v1628 = vpop.f32.mrf.mxu0
        %v1629 = vadd.f32 %v1449, %v1628
        %1630 = vdwg.mxu0
        %1631 = vmatpush.bf16.msra.mxu0 %v1582
        %1632 = vmatpush.bf16.msra.mxu0 %v1578
        %1633 = vmatpush.bf16.msra.mxu0 %v1574
        %1634 = vmatpush.bf16.msra.mxu0 %v1570
        %1635 = vmatpush.bf16.msra.mxu0 %v1566
        %1636 = vmatpush.bf16.msra.mxu0 %v1562
        %1637 = vmatpush.bf16.msra.mxu0 %v1558
        %1638 = vmatpush.bf16.msra.mxu0 %v1554
        %1639 = vmatmul.bf16.gmra.mxu0 %v1414
        %v1640 = vpop.f32.mrf.mxu0
        %v1641 = vadd.f32 %v1450, %v1640
        %v1642 = vpop.f32.mrf.mxu0
        %v1643 = vadd.f32 %v1450, %v1642
        %1644 = vdwg.mxu0
        %1645 = vmatpush.bf16.msra.mxu0 %v1583
        %1646 = vmatpush.bf16.msra.mxu0 %v1579
        %1647 = vmatpush.bf16.msra.mxu0 %v1575
        %1648 = vmatpush.bf16.msra.mxu0 %v1571
        %1649 = vmatpush.bf16.msra.mxu0 %v1567
        %1650 = vmatpush.bf16.msra.mxu0 %v1563
        %1651 = vmatpush.bf16.msra.mxu0 %v1559
        %1652 = vmatpush.bf16.msra.mxu0 %v1555
        %1653 = vmatmul.bf16.gmra.mxu0 %v1414
        %v1654 = vpop.f32.mrf.mxu0
        %v1655 = vadd.f32 %v1451, %v1654
        %v1656 = vpop.f32.mrf.mxu0
        %v1657 = vadd.f32 %v1451, %v1656
        %1658 = vdwg.mxu0
        %1659 = vmatpush.bf16.msra.mxu0 %v1584
        %1660 = vmatpush.bf16.msra.mxu0 %v1580
        %1661 = vmatpush.bf16.msra.mxu0 %v1576
        %1662 = vmatpush.bf16.msra.mxu0 %v1572
        %1663 = vmatpush.bf16.msra.mxu0 %v1568
        %1664 = vmatpush.bf16.msra.mxu0 %v1564
        %1665 = vmatpush.bf16.msra.mxu0 %v1560
        %1666 = vmatpush.bf16.msra.mxu0 %v1556
        %1667 = vmatmul.bf16.gmra.mxu0 %v1414
        %v1668 = vpop.f32.mrf.mxu0
        %v1669 = vadd.f32 %v1452, %v1668
        %v1670 = vpop.f32.mrf.mxu0
        %v1671 = vadd.f32 %v1452, %v1670
        %1672 = vdwg.mxu0
        %v1673 = vmul.f32 %v1627, 1.702
        %v1674 = vmul.f32 %v1641, 1.702
        %v1675 = vmul.f32 %v1655, 1.702
        %v1676 = vmul.f32 %v1669, 1.702
        %v1677 = vmul.f32 %v1629, 1.702
        %v1678 = vmul.f32 %v1643, 1.702
        %v1679 = vmul.f32 %v1657, 1.702
        %v1680 = vmul.f32 %v1671, 1.702
        %v1681 = vxor.u32 %v1673, 2147483648
        %v1682 = vxor.u32 %v1674, 2147483648
        %v1683 = vxor.u32 %v1675, 2147483648
        %v1684 = vxor.u32 %v1676, 2147483648
        %v1685 = vxor.u32 %v1677, 2147483648
        %v1686 = vxor.u32 %v1678, 2147483648
        %v1687 = vxor.u32 %v1679, 2147483648
        %v1688 = vxor.u32 %v1680, 2147483648
        %v1689 = vmul.f32 %v1681, 1.442695
        %v1690 = vpow.pop %v1689
        %v1691 = vmul.f32 %v1682, 1.442695
        %v1692 = vpow.pop %v1691
        %v1693 = vmul.f32 %v1683, 1.442695
        %v1694 = vpow.pop %v1693
        %v1695 = vmul.f32 %v1684, 1.442695
        %v1696 = vpow.pop %v1695
        %v1697 = vmul.f32 %v1685, 1.442695
        %v1698 = vpow.pop %v1697
        %v1699 = vmul.f32 %v1686, 1.442695
        %v1700 = vpow.pop %v1699
        %v1701 = vmul.f32 %v1687, 1.442695
        %v1702 = vpow.pop %v1701
        %v1703 = vmul.f32 %v1688, 1.442695
        %v1704 = vpow.pop %v1703
        %v1705 = vadd.f32 %v1690, 1.0
        %v1706 = vadd.f32 %v1692, 1.0
        %v1707 = vadd.f32 %v1694, 1.0
        %v1708 = vadd.f32 %v1696, 1.0
        %v1709 = vadd.f32 %v1698, 1.0
        %v1710 = vadd.f32 %v1700, 1.0
        %v1711 = vadd.f32 %v1702, 1.0
        %v1712 = vadd.f32 %v1704, 1.0
        %v1713 = vrcp.pop %v1705
        %v1714 = vmul.f32 %v1705, %v1713
        %v1715 = vsub.f32 1.0, %v1714
        %v1716 = vmul.f32 %v1713, %v1715
        %v1717 = vadd.f32 %v1713, %v1716
        %vm1718 = vweird.f32 %v1705
        %vm1719 = vweird.f32 %v1713
        %vm1720 = vmor %vm1718, %vm1719
        %v1721 = vsel %vm1720, %v1713, %v1717
        %v1722 = vand.u32 2147483647, %v1705
        %vm1723 = vcmp.eq.f32.partialorder %v1722, 8.507059e+37
        %v1724 = vand.u32 %v1705, 2147483648
        %v1725 = vor.u32 1.1754944e-38, %v1724
        %v1726 = vsel %vm1723, %v1725, %v1721
        %v1727 = vmul.f32 1.0, %v1726
        %v1728 = vrcp.pop %v1706
        %v1729 = vmul.f32 %v1706, %v1728
        %v1730 = vsub.f32 1.0, %v1729
        %v1731 = vmul.f32 %v1728, %v1730
        %v1732 = vadd.f32 %v1728, %v1731
        %vm1733 = vweird.f32 %v1706
        %vm1734 = vweird.f32 %v1728
        %vm1735 = vmor %vm1733, %vm1734
        %v1736 = vsel %vm1735, %v1728, %v1732
        %v1737 = vand.u32 2147483647, %v1706
        %vm1738 = vcmp.eq.f32.partialorder %v1737, 8.507059e+37
        %v1739 = vand.u32 %v1706, 2147483648
        %v1740 = vor.u32 1.1754944e-38, %v1739
        %v1741 = vsel %vm1738, %v1740, %v1736
        %v1742 = vmul.f32 1.0, %v1741
        %v1743 = vrcp.pop %v1707
        %v1744 = vmul.f32 %v1707, %v1743
        %v1745 = vsub.f32 1.0, %v1744
        %v1746 = vmul.f32 %v1743, %v1745
        %v1747 = vadd.f32 %v1743, %v1746
        %vm1748 = vweird.f32 %v1707
        %vm1749 = vweird.f32 %v1743
        %vm1750 = vmor %vm1748, %vm1749
        %v1751 = vsel %vm1750, %v1743, %v1747
        %v1752 = vand.u32 2147483647, %v1707
        %vm1753 = vcmp.eq.f32.partialorder %v1752, 8.507059e+37
        %v1754 = vand.u32 %v1707, 2147483648
        %v1755 = vor.u32 1.1754944e-38, %v1754
        %v1756 = vsel %vm1753, %v1755, %v1751
        %v1757 = vmul.f32 1.0, %v1756
        %v1758 = vrcp.pop %v1708
        %v1759 = vmul.f32 %v1708, %v1758
        %v1760 = vsub.f32 1.0, %v1759
        %v1761 = vmul.f32 %v1758, %v1760
        %v1762 = vadd.f32 %v1758, %v1761
        %vm1763 = vweird.f32 %v1708
        %vm1764 = vweird.f32 %v1758
        %vm1765 = vmor %vm1763, %vm1764
        %v1766 = vsel %vm1765, %v1758, %v1762
        %v1767 = vand.u32 2147483647, %v1708
        %vm1768 = vcmp.eq.f32.partialorder %v1767, 8.507059e+37
        %v1769 = vand.u32 %v1708, 2147483648
        %v1770 = vor.u32 1.1754944e-38, %v1769
        %v1771 = vsel %vm1768, %v1770, %v1766
        %v1772 = vmul.f32 1.0, %v1771
        %v1773 = vrcp.pop %v1709
        %v1774 = vmul.f32 %v1709, %v1773
        %v1775 = vsub.f32 1.0, %v1774
        %v1776 = vmul.f32 %v1773, %v1775
        %v1777 = vadd.f32 %v1773, %v1776
        %vm1778 = vweird.f32 %v1709
        %vm1779 = vweird.f32 %v1773
        %vm1780 = vmor %vm1778, %vm1779
        %v1781 = vsel %vm1780, %v1773, %v1777
        %v1782 = vand.u32 2147483647, %v1709
        %vm1783 = vcmp.eq.f32.partialorder %v1782, 8.507059e+37
        %v1784 = vand.u32 %v1709, 2147483648
        %v1785 = vor.u32 1.1754944e-38, %v1784
        %v1786 = vsel %vm1783, %v1785, %v1781
        %v1787 = vmul.f32 1.0, %v1786
        %v1788 = vrcp.pop %v1710
        %v1789 = vmul.f32 %v1710, %v1788
        %v1790 = vsub.f32 1.0, %v1789
        %v1791 = vmul.f32 %v1788, %v1790
        %v1792 = vadd.f32 %v1788, %v1791
        %vm1793 = vweird.f32 %v1710
        %vm1794 = vweird.f32 %v1788
        %vm1795 = vmor %vm1793, %vm1794
        %v1796 = vsel %vm1795, %v1788, %v1792
        %v1797 = vand.u32 2147483647, %v1710
        %vm1798 = vcmp.eq.f32.partialorder %v1797, 8.507059e+37
        %v1799 = vand.u32 %v1710, 2147483648
        %v1800 = vor.u32 1.1754944e-38, %v1799
        %v1801 = vsel %vm1798, %v1800, %v1796
        %v1802 = vmul.f32 1.0, %v1801
        %v1803 = vrcp.pop %v1711
        %v1804 = vmul.f32 %v1711, %v1803
        %v1805 = vsub.f32 1.0, %v1804
        %v1806 = vmul.f32 %v1803, %v1805
        %v1807 = vadd.f32 %v1803, %v1806
        %vm1808 = vweird.f32 %v1711
        %vm1809 = vweird.f32 %v1803
        %vm1810 = vmor %vm1808, %vm1809
        %v1811 = vsel %vm1810, %v1803, %v1807
        %v1812 = vand.u32 2147483647, %v1711
        %vm1813 = vcmp.eq.f32.partialorder %v1812, 8.507059e+37
        %v1814 = vand.u32 %v1711, 2147483648
        %v1815 = vor.u32 1.1754944e-38, %v1814
        %v1816 = vsel %vm1813, %v1815, %v1811
        %v1817 = vmul.f32 1.0, %v1816
        %v1818 = vrcp.pop %v1712
        %v1819 = vmul.f32 %v1712, %v1818
        %v1820 = vsub.f32 1.0, %v1819
        %v1821 = vmul.f32 %v1818, %v1820
        %v1822 = vadd.f32 %v1818, %v1821
        %vm1823 = vweird.f32 %v1712
        %vm1824 = vweird.f32 %v1818
        %vm1825 = vmor %vm1823, %vm1824
        %v1826 = vsel %vm1825, %v1818, %v1822
        %v1827 = vand.u32 2147483647, %v1712
        %vm1828 = vcmp.eq.f32.partialorder %v1827, 8.507059e+37
        %v1829 = vand.u32 %v1712, 2147483648
        %v1830 = vor.u32 1.1754944e-38, %v1829
        %v1831 = vsel %vm1828, %v1830, %v1826
        %v1832 = vmul.f32 1.0, %v1831
        %v1833 = vmul.f32 %v1627, %v1727
        %v1834 = vmul.f32 %v1641, %v1742
        %v1835 = vmul.f32 %v1655, %v1757
        %v1836 = vmul.f32 %v1669, %v1772
        %v1837 = vmul.f32 %v1629, %v1787
        %v1838 = vmul.f32 %v1643, %v1802
        %v1839 = vmul.f32 %v1657, %v1817
        %v1840 = vmul.f32 %v1671, %v1832
        %v1841 = vpack.c.bf16 %v1837, %v1833
        %v1842 = vpack.c.bf16 %v1838, %v1834
        %v1843 = vpack.c.bf16 %v1839, %v1835
        %v1844 = vpack.c.bf16 %v1840, %v1836
        %v1845 = vld [vmem:[%s598] sm:$0xf]
        %v1846 = vld [vmem:[%s598 + $0x4] sm:$0xf]
        %v1847 = vld [vmem:[%s598 + $0x8] sm:$0xf]
        %v1848 = vld [vmem:[%s598 + $0xc] sm:$0xf]
        %v1849 = vld [vmem:[%s598 + $0x10] sm:$0xf]
        %v1850 = vld [vmem:[%s598 + $0x14] sm:$0xf]
        %v1851 = vld [vmem:[%s598 + $0x18] sm:$0xf]
        %v1852 = vld [vmem:[%s598 + $0x1c] sm:$0xf]
        %v1853 = vld [vmem:[%s598 + $0x20] sm:$0xf]
        %v1854 = vld [vmem:[%s598 + $0x24] sm:$0xf]
        %v1855 = vld [vmem:[%s598 + $0x28] sm:$0xf]
        %v1856 = vld [vmem:[%s598 + $0x2c] sm:$0xf]
        %v1857 = vld [vmem:[%s598 + $0x30] sm:$0xf]
        %v1858 = vld [vmem:[%s598 + $0x34] sm:$0xf]
        %v1859 = vld [vmem:[%s598 + $0x38] sm:$0xf]
        %v1860 = vld [vmem:[%s598 + $0x3c] sm:$0xf]
        %v1861 = vld [vmem:[%s598 + $0x40] sm:$0xf]
        %v1862 = vld [vmem:[%s598 + $0x44] sm:$0xf]
        %v1863 = vld [vmem:[%s598 + $0x48] sm:$0xf]
        %v1864 = vld [vmem:[%s598 + $0x4c] sm:$0xf]
        %v1865 = vld [vmem:[%s598 + $0x50] sm:$0xf]
        %v1866 = vld [vmem:[%s598 + $0x54] sm:$0xf]
        %v1867 = vld [vmem:[%s598 + $0x58] sm:$0xf]
        %v1868 = vld [vmem:[%s598 + $0x5c] sm:$0xf]
        %v1869 = vld [vmem:[%s598 + $0x60] sm:$0xf]
        %v1870 = vld [vmem:[%s598 + $0x64] sm:$0xf]
        %v1871 = vld [vmem:[%s598 + $0x68] sm:$0xf]
        %v1872 = vld [vmem:[%s598 + $0x6c] sm:$0xf]
        %v1873 = vld [vmem:[%s598 + $0x70] sm:$0xf]
        %v1874 = vld [vmem:[%s598 + $0x74] sm:$0xf]
        %v1875 = vld [vmem:[%s598 + $0x78] sm:$0xf]
        %v1876 = vld [vmem:[%s598 + $0x7c] sm:$0xf]
        %v1877 = vld [vmem:[%s598 + $0x80] sm:$0xf]
        %v1878 = vld [vmem:[%s598 + $0x84] sm:$0xf]
        %v1879 = vld [vmem:[%s598 + $0x88] sm:$0xf]
        %v1880 = vld [vmem:[%s598 + $0x8c] sm:$0xf]
        %v1881 = vld [vmem:[%s598 + $0x90] sm:$0xf]
        %v1882 = vld [vmem:[%s598 + $0x94] sm:$0xf]
        %v1883 = vld [vmem:[%s598 + $0x98] sm:$0xf]
        %v1884 = vld [vmem:[%s598 + $0x9c] sm:$0xf]
        %v1885 = vld [vmem:[%s598 + $0xa0] sm:$0xf]
        %v1886 = vld [vmem:[%s598 + $0xa4] sm:$0xf]
        %v1887 = vld [vmem:[%s598 + $0xa8] sm:$0xf]
        %v1888 = vld [vmem:[%s598 + $0xac] sm:$0xf]
        %v1889 = vld [vmem:[%s598 + $0xb0] sm:$0xf]
        %v1890 = vld [vmem:[%s598 + $0xb4] sm:$0xf]
        %v1891 = vld [vmem:[%s598 + $0xb8] sm:$0xf]
        %v1892 = vld [vmem:[%s598 + $0xbc] sm:$0xf]
        %v1893 = vld [vmem:[%s598 + $0xc0] sm:$0xf]
        %v1894 = vld [vmem:[%s598 + $0xc4] sm:$0xf]
        %v1895 = vld [vmem:[%s598 + $0xc8] sm:$0xf]
        %v1896 = vld [vmem:[%s598 + $0xcc] sm:$0xf]
        %v1897 = vld [vmem:[%s598 + $0xd0] sm:$0xf]
        %v1898 = vld [vmem:[%s598 + $0xd4] sm:$0xf]
        %v1899 = vld [vmem:[%s598 + $0xd8] sm:$0xf]
        %v1900 = vld [vmem:[%s598 + $0xdc] sm:$0xf]
        %v1901 = vld [vmem:[%s598 + $0xe0] sm:$0xf]
        %v1902 = vld [vmem:[%s598 + $0xe4] sm:$0xf]
        %v1903 = vld [vmem:[%s598 + $0xe8] sm:$0xf]
        %v1904 = vld [vmem:[%s598 + $0xec] sm:$0xf]
        %v1905 = vld [vmem:[%s598 + $0xf0] sm:$0xf]
        %v1906 = vld [vmem:[%s598 + $0xf4] sm:$0xf]
        %v1907 = vld [vmem:[%s598 + $0xf8] sm:$0xf]
        %v1908 = vld [vmem:[%s598 + $0xfc] sm:$0xf]
        %v1973 = vunpack.c.l.b16 %v1845
        %v1974 = vunpack.c.l.b16 %v1846
        %v1975 = vunpack.c.l.b16 %v1847
        %v1976 = vunpack.c.l.b16 %v1848
        %v1977 = vunpack.c.l.b16 %v1849
        %v1978 = vunpack.c.l.b16 %v1850
        %v1979 = vunpack.c.l.b16 %v1851
        %v1980 = vunpack.c.l.b16 %v1852
        %v1981 = vunpack.c.l.b16 %v1853
        %v1982 = vunpack.c.l.b16 %v1854
        %v1983 = vunpack.c.l.b16 %v1855
        %v1984 = vunpack.c.l.b16 %v1856
        %v1985 = vunpack.c.l.b16 %v1857
        %v1986 = vunpack.c.l.b16 %v1858
        %v1987 = vunpack.c.l.b16 %v1859
        %v1988 = vunpack.c.l.b16 %v1860
        %v1989 = vunpack.c.l.b16 %v1861
        %v1990 = vunpack.c.l.b16 %v1862
        %v1991 = vunpack.c.l.b16 %v1863
        %v1992 = vunpack.c.l.b16 %v1864
        %v1993 = vunpack.c.l.b16 %v1865
        %v1994 = vunpack.c.l.b16 %v1866
        %v1995 = vunpack.c.l.b16 %v1867
        %v1996 = vunpack.c.l.b16 %v1868
        %v1997 = vunpack.c.l.b16 %v1869
        %v1998 = vunpack.c.l.b16 %v1870
        %v1999 = vunpack.c.l.b16 %v1871
        %v2000 = vunpack.c.l.b16 %v1872
        %v2001 = vunpack.c.l.b16 %v1873
        %v2002 = vunpack.c.l.b16 %v1874
        %v2003 = vunpack.c.l.b16 %v1875
        %v2004 = vunpack.c.l.b16 %v1876
        %v2005 = vunpack.c.l.b16 %v1877
        %v2006 = vunpack.c.l.b16 %v1878
        %v2007 = vunpack.c.l.b16 %v1879
        %v2008 = vunpack.c.l.b16 %v1880
        %v2009 = vunpack.c.l.b16 %v1881
        %v2010 = vunpack.c.l.b16 %v1882
        %v2011 = vunpack.c.l.b16 %v1883
        %v2012 = vunpack.c.l.b16 %v1884
        %v2013 = vunpack.c.l.b16 %v1885
        %v2014 = vunpack.c.l.b16 %v1886
        %v2015 = vunpack.c.l.b16 %v1887
        %v2016 = vunpack.c.l.b16 %v1888
        %v2017 = vunpack.c.l.b16 %v1889
        %v2018 = vunpack.c.l.b16 %v1890
        %v2019 = vunpack.c.l.b16 %v1891
        %v2020 = vunpack.c.l.b16 %v1892
        %v2021 = vunpack.c.l.b16 %v1893
        %v2022 = vunpack.c.l.b16 %v1894
        %v2023 = vunpack.c.l.b16 %v1895
        %v2024 = vunpack.c.l.b16 %v1896
        %v2025 = vunpack.c.l.b16 %v1897
        %v2026 = vunpack.c.l.b16 %v1898
        %v2027 = vunpack.c.l.b16 %v1899
        %v2028 = vunpack.c.l.b16 %v1900
        %v2029 = vunpack.c.l.b16 %v1901
        %v2030 = vunpack.c.l.b16 %v1902
        %v2031 = vunpack.c.l.b16 %v1903
        %v2032 = vunpack.c.l.b16 %v1904
        %v2033 = vunpack.c.l.b16 %v1905
        %v2034 = vunpack.c.l.b16 %v1906
        %v2035 = vunpack.c.l.b16 %v1907
        %v2036 = vunpack.c.l.b16 %v1908
        %v2037 = vpack.c.b16 %v1974, %v1973
        %v2038 = vpack.c.b16 %v1976, %v1975
        %v2039 = vpack.c.b16 %v1978, %v1977
        %v2040 = vpack.c.b16 %v1980, %v1979
        %v2041 = vpack.c.b16 %v1982, %v1981
        %v2042 = vpack.c.b16 %v1984, %v1983
        %v2043 = vpack.c.b16 %v1986, %v1985
        %v2044 = vpack.c.b16 %v1988, %v1987
        %v2045 = vpack.c.b16 %v1990, %v1989
        %v2046 = vpack.c.b16 %v1992, %v1991
        %v2047 = vpack.c.b16 %v1994, %v1993
        %v2048 = vpack.c.b16 %v1996, %v1995
        %v2049 = vpack.c.b16 %v1998, %v1997
        %v2050 = vpack.c.b16 %v2000, %v1999
        %v2051 = vpack.c.b16 %v2002, %v2001
        %v2052 = vpack.c.b16 %v2004, %v2003
        %v2053 = vpack.c.b16 %v2006, %v2005
        %v2054 = vpack.c.b16 %v2008, %v2007
        %v2055 = vpack.c.b16 %v2010, %v2009
        %v2056 = vpack.c.b16 %v2012, %v2011
        %v2057 = vpack.c.b16 %v2014, %v2013
        %v2058 = vpack.c.b16 %v2016, %v2015
        %v2059 = vpack.c.b16 %v2018, %v2017
        %v2060 = vpack.c.b16 %v2020, %v2019
        %v2061 = vpack.c.b16 %v2022, %v2021
        %v2062 = vpack.c.b16 %v2024, %v2023
        %v2063 = vpack.c.b16 %v2026, %v2025
        %v2064 = vpack.c.b16 %v2028, %v2027
        %v2065 = vpack.c.b16 %v2030, %v2029
        %v2066 = vpack.c.b16 %v2032, %v2031
        %v2067 = vpack.c.b16 %v2034, %v2033
        %v2068 = vpack.c.b16 %v2036, %v2035
        %2101 = vmatpush.bf16.msra.mxu0 %v2044
        %2102 = vmatpush.bf16.msra.mxu0 %v2043
        %2103 = vmatpush.bf16.msra.mxu0 %v2042
        %2104 = vmatpush.bf16.msra.mxu0 %v2041
        %2105 = vmatpush.bf16.msra.mxu0 %v2040
        %2106 = vmatpush.bf16.msra.mxu0 %v2039
        %2107 = vmatpush.bf16.msra.mxu0 %v2038
        %2108 = vmatpush.bf16.msra.mxu0 %v2037
        %2109 = vmatmul.bf16.gmra.mxu0 %v1841
        %v2110 = vpop.f32.mrf.mxu0
        %v2111 = vadd.f32 0.0, %v2110
        %v2112 = vpop.f32.mrf.mxu0
        %v2113 = vadd.f32 0.0, %v2112
        %2114 = vdwg.mxu0
        %2115 = vmatpush.bf16.msra.mxu0 %v2052
        %2116 = vmatpush.bf16.msra.mxu0 %v2051
        %2117 = vmatpush.bf16.msra.mxu0 %v2050
        %2118 = vmatpush.bf16.msra.mxu0 %v2049
        %2119 = vmatpush.bf16.msra.mxu0 %v2048
        %2120 = vmatpush.bf16.msra.mxu0 %v2047
        %2121 = vmatpush.bf16.msra.mxu0 %v2046
        %2122 = vmatpush.bf16.msra.mxu0 %v2045
        %2123 = vmatmul.bf16.gmra.mxu0 %v1842
        %v2124 = vpop.f32.mrf.mxu0
        %v2125 = vadd.f32 %v2111, %v2124
        %v2126 = vpop.f32.mrf.mxu0
        %v2127 = vadd.f32 %v2113, %v2126
        %2128 = vdwg.mxu0
        %2129 = vmatpush.bf16.msra.mxu0 %v2060
        %2130 = vmatpush.bf16.msra.mxu0 %v2059
        %2131 = vmatpush.bf16.msra.mxu0 %v2058
        %2132 = vmatpush.bf16.msra.mxu0 %v2057
        %2133 = vmatpush.bf16.msra.mxu0 %v2056
        %2134 = vmatpush.bf16.msra.mxu0 %v2055
        %2135 = vmatpush.bf16.msra.mxu0 %v2054
        %2136 = vmatpush.bf16.msra.mxu0 %v2053
        %2137 = vmatmul.bf16.gmra.mxu0 %v1843
        %v2138 = vpop.f32.mrf.mxu0
        %v2139 = vadd.f32 %v2125, %v2138
        %v2140 = vpop.f32.mrf.mxu0
        %v2141 = vadd.f32 %v2127, %v2140
        %2142 = vdwg.mxu0
        %2143 = vmatpush.bf16.msra.mxu0 %v2068
        %2144 = vmatpush.bf16.msra.mxu0 %v2067
        %2145 = vmatpush.bf16.msra.mxu0 %v2066
        %2146 = vmatpush.bf16.msra.mxu0 %v2065
        %2147 = vmatpush.bf16.msra.mxu0 %v2064
        %2148 = vmatpush.bf16.msra.mxu0 %v2063
        %2149 = vmatpush.bf16.msra.mxu0 %v2062
        %2150 = vmatpush.bf16.msra.mxu0 %v2061
        %2151 = vmatmul.bf16.gmra.mxu0 %v1844
        %v2152 = vpop.f32.mrf.mxu0
        %v2153 = vadd.f32 %v2139, %v2152
        %v2154 = vpop.f32.mrf.mxu0
        %v2155 = vadd.f32 %v2141, %v2154
        %2156 = vdwg.mxu0
        %v2157 = vadd.f32 %v1366, %v2153
        %v2158 = vadd.f32 %v1367, %v2155
        %v2159 = vperm.slane %v799, 0
        %v2160 = vadd.f32 %v2157, %v2159
        %v2161 = vadd.f32 %v2158, %v2159
        %2162 = vst [vmem:[#allocation2] sm:$0xff] %v2160
        %2163 = vst [vmem:[#allocation2 + $0x8] sm:$0xff] %v2161
        %p2164 = scmp.eq.s32.totalorder %s26, 1
        // Predicated region
        $region109: #{tpu_custom_call.1} parent=63 // pred_check
          %p2165 = pneg %p2164
        $region110: #{tpu_custom_call.1} parent=63 // pred_check_branch
          %2167 = sbr.rel (%p2165) target = $region112
        $region111: #{tpu_custom_call.1} parent=63 // pred_region
          %v2168 = vld [vmem:[#allocation10 + $0x2] sm:$0x1]
          %v2169 = vperm.slane %v2168, 0
          %v2170 = vmul.f32 %v2160, %v2169
          %v2171 = vmul.f32 %v2161, %v2169
          %2172 = vst [vmem:[#allocation18] sm:$0xff] %v2170
          %2173 = vst [vmem:[#allocation18 + $0x8] sm:$0xff] %v2171
        $region112: #{tpu_custom_call.1} parent=63 // pred_fallthru
          _
        // Predicated region
        $region113: #{tpu_custom_call.1} parent=63 // pred_check
          %p2174 = pneg %p305
        $region114: #{tpu_custom_call.1} parent=63 // pred_check_branch
          %2176 = sbr.rel (%p2174) target = $region116
        $region115: #{tpu_custom_call.1} parent=63 // pred_region
          %2178 = vsyncadd [#allocation6], 0
          %s2179 = sshll.u32 [#allocation18], 4
          %s2180 = int_to_ptr.vmem [resolvable:$true] %s2179
          %s2181 = sshll.u32 %s11, 4
          %s2182 = int_to_ptr.hbm [resolvable:$true] %s2181
          %2187 = dma.vmem_to_hbm [thread:$0]  %s2180, 256, %s2182, [#allocation6], 128, 128, 8
        $region116: #{tpu_custom_call.1} parent=63 // pred_fallthru
          _
        // Predicated region
        $region117: #{tpu_custom_call.1} parent=63 // pred_check
          %p2188 = pneg %p305
        $region118: #{tpu_custom_call.1} parent=63 // pred_check_branch
          %2190 = sbr.rel (%p2188) target = $region120
        $region119: #{tpu_custom_call.1} parent=63 // pred_region
          %2192 = dma.done [#allocation6], 256
        $region120: #{tpu_custom_call.1} parent=63 // pred_fallthru
          _
      $region64: #{tpu_custom_call.1} parent=5 // pred_fallthru
        _
      %p2193 = scmp.le.s32.totalorder 2, %s21
      // Predicated region
      $region121: #{tpu_custom_call.1} parent=5 // pred_check
        %p2194 = pneg %p2193
      $region122: #{tpu_custom_call.1} parent=5 // pred_check_branch
        %2196 = sbr.rel (%p2194) target = $region124
      $region123: #{tpu_custom_call.1} parent=5 // pred_region
        %s2197 = ssub.s32 %s21, 2
      $region124: #{tpu_custom_call.1} parent=5 // pred_fallthru
        _
    $region6: #{tpu_custom_call.1} parent=1 // loop_footer
      %s25 = sadd.s32 1, %s21
    $region7: #{tpu_custom_call.1} parent=1 // loop_footer_branch
      %20 = sbr.rel target = $region3
    $region8: #{tpu_custom_call.1} parent=1 // loop_exit
      _
    %2198 = vsyncpa [#allocation5], 1
    %s2199 = scalar_lea.sflag [#allocation5], 1
    %2200 = vsyncpa %s2199, 1
    %2201 = vsyncpa [#allocation8], 1
    %2202 = vsyncpa [#allocation11], 1
    %2203 = vsyncpa [#allocation6], 1
    %s2204 = scalar_lea.sflag [#allocation6], 1
    %2205 = vsyncpa %s2204, 1

</llo_original>
